<compile_context>
chip_gen: v7x
topology: tpu7x:2x2x1
jax: 0.10.0
libtpu: 0.0.40
codegen_flags: <defaults>
</compile_context>

<pallas_src>
import functools
import math

import jax
import jax.numpy as jnp
from jax import lax
from jax.experimental import pallas as pl
from jax.experimental.pallas import tpu as pltpu

EPS = 1e-5
INV_SQRT2 = 1.0 / math.sqrt(2.0)


def _round_up(v, m):
    return ((v + m - 1) // m) * m


def _erf(x):
    # Abramowitz & Stegun 7.1.26 (max abs err ~1.5e-7): uses only exp / div / mul / where,
    # so we do not depend on a hardware erf lowering while keeping exact-GELU semantics.
    p = 0.3275911
    a1, a2, a3, a4, a5 = 0.254829592, -0.284496736, 1.421413741, -1.453152027, 1.061405429
    ax = jnp.abs(x)
    t = 1.0 / (1.0 + p * ax)
    poly = ((((a5 * t + a4) * t + a3) * t + a2) * t + a1) * t
    y = 1.0 - poly * jnp.exp(-(ax * ax))
    return jnp.where(x >= 0.0, y, -y)


def _gelu(x):
    # exact (erf) GELU == PyTorch nn.GELU() default
    return 0.5 * x * (1.0 + _erf(x * INV_SQRT2))


def _instance_norm(y):
    # y: (C, H*W), one sample, channel-major; biased per-channel stats == nn.InstanceNorm2d
    # (default affine=False, track_running_stats=False)
    mean = jnp.mean(y, axis=-1, keepdims=True)
    var = jnp.mean((y - mean) ** 2, axis=-1, keepdims=True)
    return (y - mean) * lax.rsqrt(var + EPS)


def encoder_kernel(x_ref, w1_ref, b1_ref, w2_ref, b2_ref, wd_ref, bd_ref,
                   sel_ref, mask_ref, res_ref, down_ref, buf, patches,
                   *, H, W, cin, cout, cp, off):
    hw = H * W
    buf_len = buf.shape[1]

    # Zero the flat buffer every step (row padding + unused channel rows).  Re-done per grid
    # step so the batch axis is safely "parallel" (each core owns its scratch).  ~8 KiB, trivial.
    buf[...] = jnp.zeros(buf.shape, jnp.bfloat16)

    # Row-wrap masks for the dx=0 / dx=2 taps of the flattened (row-major, width W) conv.
    m_left = mask_ref[0:1, :]    # keep where x_in_row > 0      (bf16 0/1)
    m_right = mask_ref[1:2, :]   # keep where x_in_row < W - 1  (bf16 0/1)

    def build_patches():
        # buf rows [0, cp) hold a zero-bordered, row-major flattened image starting at lane
        # `off`.  Tap (dy, dx) of a pad-1 3x3 conv is then a contiguous lane-slice of buf;
        # the two taps that would wrap across row boundaries get a 0/1 column mask.
        # Taps are stacked at CP-aligned (sublane-aligned) row offsets of the patch buffer.
        for k in range(9):
            dy, dx = k // 3, k % 3
            start = off + (dy - 1) * W + (dx - 1)
            sl = buf[:, pl.ds(start, hw)]                       # (cp, H*W) bf16
            if dx == 0:
                sl = sl * m_left
            elif dx == 2:
                sl = sl * m_right
            patches[k * cp:(k + 1) * cp, :] = sl

    def conv(w_ref, b_ref):
        # (Cout, 9*CP) @ (9*CP, H*W) -> (Cout, H*W): channel-major, lane-dense output, f32 acc.
        return jnp.dot(w_ref[...], patches[...],
                       preferred_element_type=jnp.float32) + b_ref[...]

    # conv1 -> InstanceNorm -> GELU
    buf[0:cin, pl.ds(off, hw)] = x_ref[0].astype(jnp.bfloat16)
    build_patches()
    y = _gelu(_instance_norm(conv(w1_ref, b1_ref)))

    # conv2 -> InstanceNorm -> GELU == x_res  (lane-dense (Cout, H*W) store, no transpose)
    buf[0:cout, pl.ds(off, hw)] = y.astype(jnp.bfloat16)
    build_patches()
    res = _gelu(_instance_norm(conv(w2_ref, b2_ref)))
    res_ref[0] = res.astype(res_ref.dtype)

    # Stride-2 down conv: same im2col machinery at full resolution (MXU output width stays a
    # lane-dense 256), then one 0/1 selection matmul picks the even rows/cols -> no strided
    # gathers or vreg relayouts (replaces the old reshape-based decimation).
    buf[0:cout, pl.ds(off, hw)] = res.astype(jnp.bfloat16)
    build_patches()
    dfull = conv(wd_ref, bd_ref)                                        # (Cout, H*W) f32
    down = jnp.dot(dfull, sel_ref[...], preferred_element_type=jnp.float32)
    down_ref[0] = down.astype(down_ref.dtype)


def ginka_encoder(x_nchw, params):
    """Forward pass of GinkaEncoder (attention=False). Returns (x_down, x_res) in NCHW."""
    N, Cin, H, W = x_nchw.shape
    Cout = params["w1"].shape[-1]
    assert H % 2 == 0 and W % 2 == 0
    Hh, Wh = H // 2, W // 2
    HW, HWq = H * W, Hh * Wh

    CP = _round_up(max(Cin, Cout), 8)          # per-tap channel stride (sublane aligned)
    OFF = _round_up(W + 1, 128)                # lane-aligned start of the image in the flat buffer
    BUF_LEN = _round_up(OFF + HW + W + 1, 128)

    # NCHW -> (N, C, H*W) is a pure metadata reshape (same bytes): no input transpose pass.
    x_flat = x_nchw.reshape(N, Cin, HW).astype(jnp.float32)

    def pack_w(w, c_in):
        # (9, c_in, Cout) -> (Cout, 9*CP) bf16, channels zero-padded to CP per tap so every
        # tap block of the patch matrix sits at a sublane-aligned offset.
        wp = jnp.zeros((9, CP, Cout), jnp.float32).at[:, :c_in, :].set(w.astype(jnp.float32))
        return wp.reshape(9 * CP, Cout).T.astype(jnp.bfloat16)

    w1 = pack_w(params["w1"], Cin)
    w2 = pack_w(params["w2"], Cout)
    wd = pack_w(params["wd"], Cout)
    b1 = params["b1"].reshape(Cout, 1).astype(jnp.float32)
    b2 = params["b2"].reshape(Cout, 1).astype(jnp.float32)
    bd = params["bd"].reshape(Cout, 1).astype(jnp.float32)

    # 0/1 masks for the two taps that would wrap across rows in the flat (width-W) layout.
    col = jnp.arange(HW, dtype=jnp.int32) % W
    masks = jnp.stack([(col > 0), (col < W - 1)]).astype(jnp.bfloat16)          # (2, HW)

    # Stride-2 decimation as a 0/1 selection matrix: down[:, m] = dfull[:, 2*(m//Wh)*W + 2*(m%Wh)]
    m = jnp.arange(HWq, dtype=jnp.int32)
    jsel = 2 * (m // Wh) * W + 2 * (m % Wh)
    sel = (jnp.arange(HW, dtype=jnp.int32)[:, None] == jsel[None, :]).astype(jnp.float32)

    kern = functools.partial(encoder_kernel, H=H, W=W, cin=Cin, cout=Cout, cp=CP, off=OFF)

    res_cm, down_cm = pl.pallas_call(
        kern,
        out_shape=(
            jax.ShapeDtypeStruct((N, Cout, HW), jnp.float32),
            jax.ShapeDtypeStruct((N, Cout, HWq), jnp.float32),
        ),
        grid_spec=pltpu.PrefetchScalarGridSpec(
            num_scalar_prefetch=0,
            grid=(N,),
            in_specs=[
                pl.BlockSpec((1, Cin, HW), lambda n: (n, 0, 0)),
                pl.BlockSpec((Cout, 9 * CP), lambda n: (0, 0)),
                pl.BlockSpec((Cout, 1), lambda n: (0, 0)),
                pl.BlockSpec((Cout, 9 * CP), lambda n: (0, 0)),
                pl.BlockSpec((Cout, 1), lambda n: (0, 0)),
                pl.BlockSpec((Cout, 9 * CP), lambda n: (0, 0)),
                pl.BlockSpec((Cout, 1), lambda n: (0, 0)),
                pl.BlockSpec((HW, HWq), lambda n: (0, 0)),
                pl.BlockSpec((2, HW), lambda n: (0, 0)),
            ],
            out_specs=(
                pl.BlockSpec((1, Cout, HW), lambda n: (n, 0, 0)),
                pl.BlockSpec((1, Cout, HWq), lambda n: (n, 0, 0)),
            ),
            scratch_shapes=[
                pltpu.VMEM((CP, BUF_LEN), jnp.bfloat16),      # flat zero-bordered image buffer
                pltpu.VMEM((9 * CP, HW), jnp.bfloat16),       # im2col patch matrix
            ],
        ),
        compiler_params=pltpu.CompilerParams(dimension_semantics=("parallel",)),
    )(x_flat, w1, b1, w2, b2, wd, bd, sel, masks)

    # channel-major (N, Cout, spatial) -> NCHW is a pure (free) reshape.
    x_res = res_cm.reshape(N, Cout, H, W)
    x_down = down_cm.reshape(N, Cout, Hh, Wh)
    return x_down, x_res


def init_params(key, cin, cout):
    """Deterministic synthetic parameters.

    Kernel weight layout: (9, Cin, Cout) with w[3*dy+dx, ci, co] == torch W[co, ci, dy, dx];
    the wrapper repacks this into the padded channel-major im2col layout (Cout, 9*CP).
    """
    k1, k2, k3, k4, k5, k6 = jax.random.split(key, 6)
    scale = 0.1
    return {
        "w1": scale * jax.random.normal(k1, (9, cin, cout), jnp.float32),
        "b1": scale * jax.random.normal(k2, (1, cout), jnp.float32),
        "w2": scale * jax.random.normal(k3, (9, cout, cout), jnp.float32),
        "b2": scale * jax.random.normal(k4, (1, cout), jnp.float32),
        "wd": scale * jax.random.normal(k5, (9, cout, cout), jnp.float32),
        "bd": scale * jax.random.normal(k6, (1, cout), jnp.float32),
    }


if __name__ == "__main__":
    N, Cin, Cout, H, W = 2, 4, 8, 16, 16

    root = jax.random.PRNGKey(0)
    kx, kp = jax.random.split(root)
    x = jax.random.normal(kx, (N, Cin, H, W), jnp.float32)   # NCHW, like PyTorch
    params = init_params(kp, Cin, Cout)

    x_down, x_res = jax.jit(ginka_encoder)(x, params)
    jax.block_until_ready((x_down, x_res))

    assert x_res.shape == (N, Cout, H, W), x_res.shape
    assert x_down.shape == (N, Cout, H // 2, W // 2), x_down.shape
    assert bool(jnp.all(jnp.isfinite(x_res))) and bool(jnp.all(jnp.isfinite(x_down)))

    print("KERNEL_OK")
</pallas_src>

<mosaic_0001>
module attributes {stable_mosaic.version = 11 : i64} {
  func.func @encoder_kernel(%arg0: i32, %arg1: memref<1x4x256xf32, #tpu.memory_space<vmem>>, %arg2: memref<8x72xbf16, #tpu.memory_space<vmem>>, %arg3: memref<8x1xf32, #tpu.memory_space<vmem>>, %arg4: memref<8x72xbf16, #tpu.memory_space<vmem>>, %arg5: memref<8x1xf32, #tpu.memory_space<vmem>>, %arg6: memref<8x72xbf16, #tpu.memory_space<vmem>>, %arg7: memref<8x1xf32, #tpu.memory_space<vmem>>, %arg8: memref<256x64xf32, #tpu.memory_space<vmem>>, %arg9: memref<2x256xbf16, #tpu.memory_space<vmem>>, %arg10: memref<1x8x256xf32, #tpu.memory_space<vmem>>, %arg11: memref<1x8x64xf32, #tpu.memory_space<vmem>>, %arg12: memref<8x512xbf16, #tpu.memory_space<vmem>>, %arg13: memref<72x256xbf16, #tpu.memory_space<vmem>>) attributes {dimension_semantics = [#tpu.dimension_semantics<parallel>], iteration_bounds = array<i64: 2>, scalar_prefetch = 0 : i64, scratch_operands = 2 : i64, tpu.core_type = #tpu.core_type<tc>, window_params = [{transform_indices = @transform_0, window_bounds = array<i64: 1, 4, 256>}, {pipeline_mode = #tpu.pipeline_mode<synchronous>, transform_indices = @transform_1, window_bounds = array<i64: 8, 72>}, {pipeline_mode = #tpu.pipeline_mode<synchronous>, transform_indices = @transform_2, window_bounds = array<i64: 8, 1>}, {pipeline_mode = #tpu.pipeline_mode<synchronous>, transform_indices = @transform_3, window_bounds = array<i64: 8, 72>}, {pipeline_mode = #tpu.pipeline_mode<synchronous>, transform_indices = @transform_4, window_bounds = array<i64: 8, 1>}, {pipeline_mode = #tpu.pipeline_mode<synchronous>, transform_indices = @transform_5, window_bounds = array<i64: 8, 72>}, {pipeline_mode = #tpu.pipeline_mode<synchronous>, transform_indices = @transform_6, window_bounds = array<i64: 8, 1>}, {pipeline_mode = #tpu.pipeline_mode<synchronous>, transform_indices = @transform_7, window_bounds = array<i64: 256, 64>}, {pipeline_mode = #tpu.pipeline_mode<synchronous>, transform_indices = @transform_8, window_bounds = array<i64: 2, 256>}, {transform_indices = @transform_9, window_bounds = array<i64: 1, 8, 256>}, {transform_indices = @transform_10, window_bounds = array<i64: 1, 8, 64>}]} {
    %cst = arith.constant 0.000000e+00 : bf16
    %0 = vector.broadcast %cst : bf16 to vector<8x512xbf16>
    %c0 = arith.constant 0 : index
    %c0_0 = arith.constant 0 : index
    %1 = vector.load %arg12[%c0, %c0_0] : memref<8x512xbf16, #tpu.memory_space<vmem>>, vector<8x512xbf16>
    tpu.vector_store %arg12[%c0, %c0_0], %0 {strides = array<i32>} : memref<8x512xbf16, #tpu.memory_space<vmem>>, vector<8x512xbf16>,
    %c0_1 = arith.constant 0 : index
    %c0_2 = arith.constant 0 : index
    %2 = vector.load %arg9[%c0_1, %c0_2] : memref<2x256xbf16, #tpu.memory_space<vmem>>, vector<1x256xbf16>
    %c1 = arith.constant 1 : index
    %c0_3 = arith.constant 0 : index
    %3 = vector.load %arg9[%c1, %c0_3] : memref<2x256xbf16, #tpu.memory_space<vmem>>, vector<1x256xbf16>
    %c0_4 = arith.constant 0 : index
    %c0_5 = arith.constant 0 : index
    %c0_6 = arith.constant 0 : index
    %4 = vector.load %arg1[%c0_4, %c0_5, %c0_6] : memref<1x4x256xf32, #tpu.memory_space<vmem>>, vector<1x4x256xf32>
    %5 = vector.shape_cast %4 : vector<1x4x256xf32> to vector<4x256xf32>
    %6 = arith.truncf %5 : vector<4x256xf32> to vector<4x256xbf16>
    %c0_7 = arith.constant 0 : index
    %c128 = arith.constant 128 : index
    %7 = vector.load %arg12[%c0_7, %c128] : memref<8x512xbf16, #tpu.memory_space<vmem>>, vector<4x256xbf16>
    tpu.vector_store %arg12[%c0_7, %c128], %6 {strides = array<i32>} : memref<8x512xbf16, #tpu.memory_space<vmem>>, vector<4x256xbf16>,
    %c0_8 = arith.constant 0 : index
    %c111 = arith.constant 111 : index
    %8 = vector.load %arg12[%c0_8, %c111] : memref<8x512xbf16, #tpu.memory_space<vmem>>, vector<8x256xbf16>
    %9 = vector.broadcast %2 : vector<1x256xbf16> to vector<8x256xbf16>
    %10 = arith.mulf %8, %9 : vector<8x256xbf16>
    %c0_9 = arith.constant 0 : index
    %c0_10 = arith.constant 0 : index
    %11 = vector.load %arg13[%c0_9, %c0_10] : memref<72x256xbf16, #tpu.memory_space<vmem>>, vector<8x256xbf16>
    tpu.vector_store %arg13[%c0_9, %c0_10], %10 {strides = array<i32>} : memref<72x256xbf16, #tpu.memory_space<vmem>>, vector<8x256xbf16>,
    %c0_11 = arith.constant 0 : index
    %c112 = arith.constant 112 : index
    %12 = vector.load %arg12[%c0_11, %c112] : memref<8x512xbf16, #tpu.memory_space<vmem>>, vector<8x256xbf16>
    %c8 = arith.constant 8 : index
    %c0_12 = arith.constant 0 : index
    %13 = vector.load %arg13[%c8, %c0_12] : memref<72x256xbf16, #tpu.memory_space<vmem>>, vector<8x256xbf16>
    tpu.vector_store %arg13[%c8, %c0_12], %12 {strides = array<i32>} : memref<72x256xbf16, #tpu.memory_space<vmem>>, vector<8x256xbf16>,
    %c0_13 = arith.constant 0 : index
    %c113 = arith.constant 113 : index
    %14 = vector.load %arg12[%c0_13, %c113] : memref<8x512xbf16, #tpu.memory_space<vmem>>, vector<8x256xbf16>
    %15 = vector.broadcast %3 : vector<1x256xbf16> to vector<8x256xbf16>
    %16 = arith.mulf %14, %15 : vector<8x256xbf16>
    %c16 = arith.constant 16 : index
    %c0_14 = arith.constant 0 : index
    %17 = vector.load %arg13[%c16, %c0_14] : memref<72x256xbf16, #tpu.memory_space<vmem>>, vector<8x256xbf16>
    tpu.vector_store %arg13[%c16, %c0_14], %16 {strides = array<i32>} : memref<72x256xbf16, #tpu.memory_space<vmem>>, vector<8x256xbf16>,
    %c0_15 = arith.constant 0 : index
    %c127 = arith.constant 127 : index
    %18 = vector.load %arg12[%c0_15, %c127] : memref<8x512xbf16, #tpu.memory_space<vmem>>, vector<8x256xbf16>
    %19 = vector.broadcast %2 : vector<1x256xbf16> to vector<8x256xbf16>
    %20 = arith.mulf %18, %19 : vector<8x256xbf16>
    %c24 = arith.constant 24 : index
    %c0_16 = arith.constant 0 : index
    %21 = vector.load %arg13[%c24, %c0_16] : memref<72x256xbf16, #tpu.memory_space<vmem>>, vector<8x256xbf16>
    tpu.vector_store %arg13[%c24, %c0_16], %20 {strides = array<i32>} : memref<72x256xbf16, #tpu.memory_space<vmem>>, vector<8x256xbf16>,
    %c0_17 = arith.constant 0 : index
    %c128_18 = arith.constant 128 : index
    %22 = vector.load %arg12[%c0_17, %c128_18] : memref<8x512xbf16, #tpu.memory_space<vmem>>, vector<8x256xbf16>
    %c32 = arith.constant 32 : index
    %c0_19 = arith.constant 0 : index
    %23 = vector.load %arg13[%c32, %c0_19] : memref<72x256xbf16, #tpu.memory_space<vmem>>, vector<8x256xbf16>
    tpu.vector_store %arg13[%c32, %c0_19], %22 {strides = array<i32>} : memref<72x256xbf16, #tpu.memory_space<vmem>>, vector<8x256xbf16>,
    %c0_20 = arith.constant 0 : index
    %c129 = arith.constant 129 : index
    %24 = vector.load %arg12[%c0_20, %c129] : memref<8x512xbf16, #tpu.memory_space<vmem>>, vector<8x256xbf16>
    %25 = vector.broadcast %3 : vector<1x256xbf16> to vector<8x256xbf16>
    %26 = arith.mulf %24, %25 : vector<8x256xbf16>
    %c40 = arith.constant 40 : index
    %c0_21 = arith.constant 0 : index
    %27 = vector.load %arg13[%c40, %c0_21] : memref<72x256xbf16, #tpu.memory_space<vmem>>, vector<8x256xbf16>
    tpu.vector_store %arg13[%c40, %c0_21], %26 {strides = array<i32>} : memref<72x256xbf16, #tpu.memory_space<vmem>>, vector<8x256xbf16>,
    %c0_22 = arith.constant 0 : index
    %c143 = arith.constant 143 : index
    %28 = vector.load %arg12[%c0_22, %c143] : memref<8x512xbf16, #tpu.memory_space<vmem>>, vector<8x256xbf16>
    %29 = vector.broadcast %2 : vector<1x256xbf16> to vector<8x256xbf16>
    %30 = arith.mulf %28, %29 : vector<8x256xbf16>
    %c48 = arith.constant 48 : index
    %c0_23 = arith.constant 0 : index
    %31 = vector.load %arg13[%c48, %c0_23] : memref<72x256xbf16, #tpu.memory_space<vmem>>, vector<8x256xbf16>
    tpu.vector_store %arg13[%c48, %c0_23], %30 {strides = array<i32>} : memref<72x256xbf16, #tpu.memory_space<vmem>>, vector<8x256xbf16>,
    %c0_24 = arith.constant 0 : index
    %c144 = arith.constant 144 : index
    %32 = vector.load %arg12[%c0_24, %c144] : memref<8x512xbf16, #tpu.memory_space<vmem>>, vector<8x256xbf16>
    %c56 = arith.constant 56 : index
    %c0_25 = arith.constant 0 : index
    %33 = vector.load %arg13[%c56, %c0_25] : memref<72x256xbf16, #tpu.memory_space<vmem>>, vector<8x256xbf16>
    tpu.vector_store %arg13[%c56, %c0_25], %32 {strides = array<i32>} : memref<72x256xbf16, #tpu.memory_space<vmem>>, vector<8x256xbf16>,
    %c0_26 = arith.constant 0 : index
    %c145 = arith.constant 145 : index
    %34 = vector.load %arg12[%c0_26, %c145] : memref<8x512xbf16, #tpu.memory_space<vmem>>, vector<8x256xbf16>
    %35 = vector.broadcast %3 : vector<1x256xbf16> to vector<8x256xbf16>
    %36 = arith.mulf %34, %35 : vector<8x256xbf16>
    %c64 = arith.constant 64 : index
    %c0_27 = arith.constant 0 : index
    %37 = vector.load %arg13[%c64, %c0_27] : memref<72x256xbf16, #tpu.memory_space<vmem>>, vector<8x256xbf16>
    tpu.vector_store %arg13[%c64, %c0_27], %36 {strides = array<i32>} : memref<72x256xbf16, #tpu.memory_space<vmem>>, vector<8x256xbf16>,
    %c0_28 = arith.constant 0 : index
    %c0_29 = arith.constant 0 : index
    %38 = vector.load %arg2[%c0_28, %c0_29] : memref<8x72xbf16, #tpu.memory_space<vmem>>, vector<8x72xbf16>
    %c0_30 = arith.constant 0 : index
    %c0_31 = arith.constant 0 : index
    %39 = vector.load %arg13[%c0_30, %c0_31] : memref<72x256xbf16, #tpu.memory_space<vmem>>, vector<72x256xbf16>
    %cst_32 = arith.constant dense<0.000000e+00> : vector<8x256xf32>
    %40 = tpu.matmul %38, %39, %cst_32 {dimension_numbers = #tpu.dot_dimension_numbers<[1], [0], [0], [1], [0, 0, 1, 1], [], []>} : vector<8x72xbf16>, vector<72x256xbf16>, vector<8x256xf32> -> vector<8x256xf32>
    %c0_33 = arith.constant 0 : index
    %c0_34 = arith.constant 0 : index
    %41 = vector.load %arg3[%c0_33, %c0_34] : memref<8x1xf32, #tpu.memory_space<vmem>>, vector<8x1xf32>
    %42 = vector.broadcast %41 : vector<8x1xf32> to vector<8x256xf32>
    %43 = arith.addf %40, %42 : vector<8x256xf32>
    %cst_35 = arith.constant dense<0.000000e+00> : vector<8xf32>
    %44 = vector.multi_reduction <add>, %43, %cst_35 [1] : vector<8x256xf32> to vector<8xf32>
    %45 = vector.shape_cast %44 : vector<8xf32> to vector<8x1xf32>
    %cst_36 = arith.constant 2.560000e+02 : f32
    %46 = vector.broadcast %cst_36 : f32 to vector<8x1xf32>
    %47 = arith.divf %45, %46 : vector<8x1xf32>
    %48 = vector.broadcast %47 : vector<8x1xf32> to vector<8x256xf32>
    %49 = arith.subf %43, %48 : vector<8x256xf32>
    %50 = arith.mulf %49, %49 : vector<8x256xf32>
    %cst_37 = arith.constant dense<0.000000e+00> : vector<8xf32>
    %51 = vector.multi_reduction <add>, %50, %cst_37 [1] : vector<8x256xf32> to vector<8xf32>
    %52 = vector.shape_cast %51 : vector<8xf32> to vector<8x1xf32>
    %cst_38 = arith.constant 2.560000e+02 : f32
    %53 = vector.broadcast %cst_38 : f32 to vector<8x1xf32>
    %54 = arith.divf %52, %53 : vector<8x1xf32>
    %55 = vector.broadcast %47 : vector<8x1xf32> to vector<8x256xf32>
    %56 = arith.subf %43, %55 : vector<8x256xf32>
    %cst_39 = arith.constant 9.99999974E-6 : f32
    %57 = vector.broadcast %cst_39 : f32 to vector<8x1xf32>
    %58 = arith.addf %54, %57 : vector<8x1xf32>
    %59 = math.rsqrt %58 : vector<8x1xf32>
    %60 = vector.broadcast %59 : vector<8x1xf32> to vector<8x256xf32>
    %61 = arith.mulf %56, %60 : vector<8x256xf32>
    %cst_40 = arith.constant 5.000000e-01 : f32
    %62 = vector.broadcast %cst_40 : f32 to vector<8x256xf32>
    %63 = arith.mulf %62, %61 : vector<8x256xf32>
    %cst_41 = arith.constant 0.707106769 : f32
    %64 = vector.broadcast %cst_41 : f32 to vector<8x256xf32>
    %65 = arith.mulf %61, %64 : vector<8x256xf32>
    %66 = math.absf %65 : vector<8x256xf32>
    %cst_42 = arith.constant 0.327591091 : f32
    %67 = vector.broadcast %cst_42 : f32 to vector<8x256xf32>
    %68 = arith.mulf %67, %66 : vector<8x256xf32>
    %cst_43 = arith.constant 1.000000e+00 : f32
    %69 = vector.broadcast %cst_43 : f32 to vector<8x256xf32>
    %70 = arith.addf %69, %68 : vector<8x256xf32>
    %cst_44 = arith.constant 1.000000e+00 : f32
    %71 = vector.broadcast %cst_44 : f32 to vector<8x256xf32>
    %72 = arith.divf %71, %70 : vector<8x256xf32>
    %cst_45 = arith.constant 1.06140542 : f32
    %73 = vector.broadcast %cst_45 : f32 to vector<8x256xf32>
    %74 = arith.mulf %73, %72 : vector<8x256xf32>
    %cst_46 = arith.constant -1.45315206 : f32
    %75 = vector.broadcast %cst_46 : f32 to vector<8x256xf32>
    %76 = arith.addf %74, %75 : vector<8x256xf32>
    %77 = arith.mulf %76, %72 : vector<8x256xf32>
    %cst_47 = arith.constant 1.42141378 : f32
    %78 = vector.broadcast %cst_47 : f32 to vector<8x256xf32>
    %79 = arith.addf %77, %78 : vector<8x256xf32>
    %80 = arith.mulf %79, %72 : vector<8x256xf32>
    %cst_48 = arith.constant -0.284496725 : f32
    %81 = vector.broadcast %cst_48 : f32 to vector<8x256xf32>
    %82 = arith.addf %80, %81 : vector<8x256xf32>
    %83 = arith.mulf %82, %72 : vector<8x256xf32>
    %cst_49 = arith.constant 0.254829586 : f32
    %84 = vector.broadcast %cst_49 : f32 to vector<8x256xf32>
    %85 = arith.addf %83, %84 : vector<8x256xf32>
    %86 = arith.mulf %85, %72 : vector<8x256xf32>
    %87 = arith.mulf %66, %66 : vector<8x256xf32>
    %cst_50 = arith.constant 0.000000e+00 : f32
    %88 = vector.broadcast %cst_50 : f32 to vector<8x256xf32>
    %89 = arith.subf %88, %87 : vector<8x256xf32>
    %90 = math.exp %89 : vector<8x256xf32>
    %91 = arith.mulf %86, %90 : vector<8x256xf32>
    %cst_51 = arith.constant 1.000000e+00 : f32
    %92 = vector.broadcast %cst_51 : f32 to vector<8x256xf32>
    %93 = arith.subf %92, %91 : vector<8x256xf32>
    %cst_52 = arith.constant 0.000000e+00 : f32
    %94 = vector.broadcast %cst_52 : f32 to vector<8x256xf32>
    %95 = arith.cmpf oge, %65, %94 : vector<8x256xf32>
    %cst_53 = arith.constant 0.000000e+00 : f32
    %96 = vector.broadcast %cst_53 : f32 to vector<8x256xf32>
    %97 = arith.subf %96, %93 : vector<8x256xf32>
    %98 = arith.select %95, %93, %97 : vector<8x256xi1>, vector<8x256xf32>
    %cst_54 = arith.constant 1.000000e+00 : f32
    %99 = vector.broadcast %cst_54 : f32 to vector<8x256xf32>
    %100 = arith.addf %99, %98 : vector<8x256xf32>
    %101 = arith.mulf %63, %100 : vector<8x256xf32>
    %102 = arith.truncf %101 : vector<8x256xf32> to vector<8x256xbf16>
    %c0_55 = arith.constant 0 : index
    %c128_56 = arith.constant 128 : index
    %103 = vector.load %arg12[%c0_55, %c128_56] : memref<8x512xbf16, #tpu.memory_space<vmem>>, vector<8x256xbf16>
    tpu.vector_store %arg12[%c0_55, %c128_56], %102 {strides = array<i32>} : memref<8x512xbf16, #tpu.memory_space<vmem>>, vector<8x256xbf16>,
    %c0_57 = arith.constant 0 : index
    %c111_58 = arith.constant 111 : index
    %104 = vector.load %arg12[%c0_57, %c111_58] : memref<8x512xbf16, #tpu.memory_space<vmem>>, vector<8x256xbf16>
    %105 = vector.broadcast %2 : vector<1x256xbf16> to vector<8x256xbf16>
    %106 = arith.mulf %104, %105 : vector<8x256xbf16>
    %c0_59 = arith.constant 0 : index
    %c0_60 = arith.constant 0 : index
    %107 = vector.load %arg13[%c0_59, %c0_60] : memref<72x256xbf16, #tpu.memory_space<vmem>>, vector<8x256xbf16>
    tpu.vector_store %arg13[%c0_59, %c0_60], %106 {strides = array<i32>} : memref<72x256xbf16, #tpu.memory_space<vmem>>, vector<8x256xbf16>,
    %c0_61 = arith.constant 0 : index
    %c112_62 = arith.constant 112 : index
    %108 = vector.load %arg12[%c0_61, %c112_62] : memref<8x512xbf16, #tpu.memory_space<vmem>>, vector<8x256xbf16>
    %c8_63 = arith.constant 8 : index
    %c0_64 = arith.constant 0 : index
    %109 = vector.load %arg13[%c8_63, %c0_64] : memref<72x256xbf16, #tpu.memory_space<vmem>>, vector<8x256xbf16>
    tpu.vector_store %arg13[%c8_63, %c0_64], %108 {strides = array<i32>} : memref<72x256xbf16, #tpu.memory_space<vmem>>, vector<8x256xbf16>,
    %c0_65 = arith.constant 0 : index
    %c113_66 = arith.constant 113 : index
    %110 = vector.load %arg12[%c0_65, %c113_66] : memref<8x512xbf16, #tpu.memory_space<vmem>>, vector<8x256xbf16>
    %111 = vector.broadcast %3 : vector<1x256xbf16> to vector<8x256xbf16>
    %112 = arith.mulf %110, %111 : vector<8x256xbf16>
    %c16_67 = arith.constant 16 : index
    %c0_68 = arith.constant 0 : index
    %113 = vector.load %arg13[%c16_67, %c0_68] : memref<72x256xbf16, #tpu.memory_space<vmem>>, vector<8x256xbf16>
    tpu.vector_store %arg13[%c16_67, %c0_68], %112 {strides = array<i32>} : memref<72x256xbf16, #tpu.memory_space<vmem>>, vector<8x256xbf16>,
    %c0_69 = arith.constant 0 : index
    %c127_70 = arith.constant 127 : index
    %114 = vector.load %arg12[%c0_69, %c127_70] : memref<8x512xbf16, #tpu.memory_space<vmem>>, vector<8x256xbf16>
    %115 = vector.broadcast %2 : vector<1x256xbf16> to vector<8x256xbf16>
    %116 = arith.mulf %114, %115 : vector<8x256xbf16>
    %c24_71 = arith.constant 24 : index
    %c0_72 = arith.constant 0 : index
    %117 = vector.load %arg13[%c24_71, %c0_72] : memref<72x256xbf16, #tpu.memory_space<vmem>>, vector<8x256xbf16>
    tpu.vector_store %arg13[%c24_71, %c0_72], %116 {strides = array<i32>} : memref<72x256xbf16, #tpu.memory_space<vmem>>, vector<8x256xbf16>,
    %c0_73 = arith.constant 0 : index
    %c128_74 = arith.constant 128 : index
    %118 = vector.load %arg12[%c0_73, %c128_74] : memref<8x512xbf16, #tpu.memory_space<vmem>>, vector<8x256xbf16>
    %c32_75 = arith.constant 32 : index
    %c0_76 = arith.constant 0 : index
    %119 = vector.load %arg13[%c32_75, %c0_76] : memref<72x256xbf16, #tpu.memory_space<vmem>>, vector<8x256xbf16>
    tpu.vector_store %arg13[%c32_75, %c0_76], %118 {strides = array<i32>} : memref<72x256xbf16, #tpu.memory_space<vmem>>, vector<8x256xbf16>,
    %c0_77 = arith.constant 0 : index
    %c129_78 = arith.constant 129 : index
    %120 = vector.load %arg12[%c0_77, %c129_78] : memref<8x512xbf16, #tpu.memory_space<vmem>>, vector<8x256xbf16>
    %121 = vector.broadcast %3 : vector<1x256xbf16> to vector<8x256xbf16>
    %122 = arith.mulf %120, %121 : vector<8x256xbf16>
    %c40_79 = arith.constant 40 : index
    %c0_80 = arith.constant 0 : index
    %123 = vector.load %arg13[%c40_79, %c0_80] : memref<72x256xbf16, #tpu.memory_space<vmem>>, vector<8x256xbf16>
    tpu.vector_store %arg13[%c40_79, %c0_80], %122 {strides = array<i32>} : memref<72x256xbf16, #tpu.memory_space<vmem>>, vector<8x256xbf16>,
    %c0_81 = arith.constant 0 : index
    %c143_82 = arith.constant 143 : index
    %124 = vector.load %arg12[%c0_81, %c143_82] : memref<8x512xbf16, #tpu.memory_space<vmem>>, vector<8x256xbf16>
    %125 = vector.broadcast %2 : vector<1x256xbf16> to vector<8x256xbf16>
    %126 = arith.mulf %124, %125 : vector<8x256xbf16>
    %c48_83 = arith.constant 48 : index
    %c0_84 = arith.constant 0 : index
    %127 = vector.load %arg13[%c48_83, %c0_84] : memref<72x256xbf16, #tpu.memory_space<vmem>>, vector<8x256xbf16>
    tpu.vector_store %arg13[%c48_83, %c0_84], %126 {strides = array<i32>} : memref<72x256xbf16, #tpu.memory_space<vmem>>, vector<8x256xbf16>,
    %c0_85 = arith.constant 0 : index
    %c144_86 = arith.constant 144 : index
    %128 = vector.load %arg12[%c0_85, %c144_86] : memref<8x512xbf16, #tpu.memory_space<vmem>>, vector<8x256xbf16>
    %c56_87 = arith.constant 56 : index
    %c0_88 = arith.constant 0 : index
    %129 = vector.load %arg13[%c56_87, %c0_88] : memref<72x256xbf16, #tpu.memory_space<vmem>>, vector<8x256xbf16>
    tpu.vector_store %arg13[%c56_87, %c0_88], %128 {strides = array<i32>} : memref<72x256xbf16, #tpu.memory_space<vmem>>, vector<8x256xbf16>,
    %c0_89 = arith.constant 0 : index
    %c145_90 = arith.constant 145 : index
    %130 = vector.load %arg12[%c0_89, %c145_90] : memref<8x512xbf16, #tpu.memory_space<vmem>>, vector<8x256xbf16>
    %131 = vector.broadcast %3 : vector<1x256xbf16> to vector<8x256xbf16>
    %132 = arith.mulf %130, %131 : vector<8x256xbf16>
    %c64_91 = arith.constant 64 : index
    %c0_92 = arith.constant 0 : index
    %133 = vector.load %arg13[%c64_91, %c0_92] : memref<72x256xbf16, #tpu.memory_space<vmem>>, vector<8x256xbf16>
    tpu.vector_store %arg13[%c64_91, %c0_92], %132 {strides = array<i32>} : memref<72x256xbf16, #tpu.memory_space<vmem>>, vector<8x256xbf16>,
    %c0_93 = arith.constant 0 : index
    %c0_94 = arith.constant 0 : index
    %134 = vector.load %arg4[%c0_93, %c0_94] : memref<8x72xbf16, #tpu.memory_space<vmem>>, vector<8x72xbf16>
    %c0_95 = arith.constant 0 : index
    %c0_96 = arith.constant 0 : index
    %135 = vector.load %arg13[%c0_95, %c0_96] : memref<72x256xbf16, #tpu.memory_space<vmem>>, vector<72x256xbf16>
    %cst_97 = arith.constant dense<0.000000e+00> : vector<8x256xf32>
    %136 = tpu.matmul %134, %135, %cst_97 {dimension_numbers = #tpu.dot_dimension_numbers<[1], [0], [0], [1], [0, 0, 1, 1], [], []>} : vector<8x72xbf16>, vector<72x256xbf16>, vector<8x256xf32> -> vector<8x256xf32>
    %c0_98 = arith.constant 0 : index
    %c0_99 = arith.constant 0 : index
    %137 = vector.load %arg5[%c0_98, %c0_99] : memref<8x1xf32, #tpu.memory_space<vmem>>, vector<8x1xf32>
    %138 = vector.broadcast %137 : vector<8x1xf32> to vector<8x256xf32>
    %139 = arith.addf %136, %138 : vector<8x256xf32>
    %cst_100 = arith.constant dense<0.000000e+00> : vector<8xf32>
    %140 = vector.multi_reduction <add>, %139, %cst_100 [1] : vector<8x256xf32> to vector<8xf32>
    %141 = vector.shape_cast %140 : vector<8xf32> to vector<8x1xf32>
    %cst_101 = arith.constant 2.560000e+02 : f32
    %142 = vector.broadcast %cst_101 : f32 to vector<8x1xf32>
    %143 = arith.divf %141, %142 : vector<8x1xf32>
    %144 = vector.broadcast %143 : vector<8x1xf32> to vector<8x256xf32>
    %145 = arith.subf %139, %144 : vector<8x256xf32>
    %146 = arith.mulf %145, %145 : vector<8x256xf32>
    %cst_102 = arith.constant dense<0.000000e+00> : vector<8xf32>
    %147 = vector.multi_reduction <add>, %146, %cst_102 [1] : vector<8x256xf32> to vector<8xf32>
    %148 = vector.shape_cast %147 : vector<8xf32> to vector<8x1xf32>
    %cst_103 = arith.constant 2.560000e+02 : f32
    %149 = vector.broadcast %cst_103 : f32 to vector<8x1xf32>
    %150 = arith.divf %148, %149 : vector<8x1xf32>
    %151 = vector.broadcast %143 : vector<8x1xf32> to vector<8x256xf32>
    %152 = arith.subf %139, %151 : vector<8x256xf32>
    %cst_104 = arith.constant 9.99999974E-6 : f32
    %153 = vector.broadcast %cst_104 : f32 to vector<8x1xf32>
    %154 = arith.addf %150, %153 : vector<8x1xf32>
    %155 = math.rsqrt %154 : vector<8x1xf32>
    %156 = vector.broadcast %155 : vector<8x1xf32> to vector<8x256xf32>
    %157 = arith.mulf %152, %156 : vector<8x256xf32>
    %cst_105 = arith.constant 5.000000e-01 : f32
    %158 = vector.broadcast %cst_105 : f32 to vector<8x256xf32>
    %159 = arith.mulf %158, %157 : vector<8x256xf32>
    %cst_106 = arith.constant 0.707106769 : f32
    %160 = vector.broadcast %cst_106 : f32 to vector<8x256xf32>
    %161 = arith.mulf %157, %160 : vector<8x256xf32>
    %162 = math.absf %161 : vector<8x256xf32>
    %cst_107 = arith.constant 0.327591091 : f32
    %163 = vector.broadcast %cst_107 : f32 to vector<8x256xf32>
    %164 = arith.mulf %163, %162 : vector<8x256xf32>
    %cst_108 = arith.constant 1.000000e+00 : f32
    %165 = vector.broadcast %cst_108 : f32 to vector<8x256xf32>
    %166 = arith.addf %165, %164 : vector<8x256xf32>
    %cst_109 = arith.constant 1.000000e+00 : f32
    %167 = vector.broadcast %cst_109 : f32 to vector<8x256xf32>
    %168 = arith.divf %167, %166 : vector<8x256xf32>
    %cst_110 = arith.constant 1.06140542 : f32
    %169 = vector.broadcast %cst_110 : f32 to vector<8x256xf32>
    %170 = arith.mulf %169, %168 : vector<8x256xf32>
    %cst_111 = arith.constant -1.45315206 : f32
    %171 = vector.broadcast %cst_111 : f32 to vector<8x256xf32>
    %172 = arith.addf %170, %171 : vector<8x256xf32>
    %173 = arith.mulf %172, %168 : vector<8x256xf32>
    %cst_112 = arith.constant 1.42141378 : f32
    %174 = vector.broadcast %cst_112 : f32 to vector<8x256xf32>
    %175 = arith.addf %173, %174 : vector<8x256xf32>
    %176 = arith.mulf %175, %168 : vector<8x256xf32>
    %cst_113 = arith.constant -0.284496725 : f32
    %177 = vector.broadcast %cst_113 : f32 to vector<8x256xf32>
    %178 = arith.addf %176, %177 : vector<8x256xf32>
    %179 = arith.mulf %178, %168 : vector<8x256xf32>
    %cst_114 = arith.constant 0.254829586 : f32
    %180 = vector.broadcast %cst_114 : f32 to vector<8x256xf32>
    %181 = arith.addf %179, %180 : vector<8x256xf32>
    %182 = arith.mulf %181, %168 : vector<8x256xf32>
    %183 = arith.mulf %162, %162 : vector<8x256xf32>
    %cst_115 = arith.constant 0.000000e+00 : f32
    %184 = vector.broadcast %cst_115 : f32 to vector<8x256xf32>
    %185 = arith.subf %184, %183 : vector<8x256xf32>
    %186 = math.exp %185 : vector<8x256xf32>
    %187 = arith.mulf %182, %186 : vector<8x256xf32>
    %cst_116 = arith.constant 1.000000e+00 : f32
    %188 = vector.broadcast %cst_116 : f32 to vector<8x256xf32>
    %189 = arith.subf %188, %187 : vector<8x256xf32>
    %cst_117 = arith.constant 0.000000e+00 : f32
    %190 = vector.broadcast %cst_117 : f32 to vector<8x256xf32>
    %191 = arith.cmpf oge, %161, %190 : vector<8x256xf32>
    %cst_118 = arith.constant 0.000000e+00 : f32
    %192 = vector.broadcast %cst_118 : f32 to vector<8x256xf32>
    %193 = arith.subf %192, %189 : vector<8x256xf32>
    %194 = arith.select %191, %189, %193 : vector<8x256xi1>, vector<8x256xf32>
    %cst_119 = arith.constant 1.000000e+00 : f32
    %195 = vector.broadcast %cst_119 : f32 to vector<8x256xf32>
    %196 = arith.addf %195, %194 : vector<8x256xf32>
    %197 = arith.mulf %159, %196 : vector<8x256xf32>
    %c0_120 = arith.constant 0 : index
    %c0_121 = arith.constant 0 : index
    %c0_122 = arith.constant 0 : index
    %198 = vector.load %arg10[%c0_120, %c0_121, %c0_122] : memref<1x8x256xf32, #tpu.memory_space<vmem>>, vector<1x8x256xf32>
    %199 = vector.shape_cast %198 : vector<1x8x256xf32> to vector<8x256xf32>
    %200 = vector.shape_cast %197 : vector<8x256xf32> to vector<1x8x256xf32>
    tpu.vector_store %arg10[%c0_120, %c0_121, %c0_122], %200 {strides = array<i32>} : memref<1x8x256xf32, #tpu.memory_space<vmem>>, vector<1x8x256xf32>,
    %201 = arith.truncf %197 : vector<8x256xf32> to vector<8x256xbf16>
    %c0_123 = arith.constant 0 : index
    %c128_124 = arith.constant 128 : index
    %202 = vector.load %arg12[%c0_123, %c128_124] : memref<8x512xbf16, #tpu.memory_space<vmem>>, vector<8x256xbf16>
    tpu.vector_store %arg12[%c0_123, %c128_124], %201 {strides = array<i32>} : memref<8x512xbf16, #tpu.memory_space<vmem>>, vector<8x256xbf16>,
    %c0_125 = arith.constant 0 : index
    %c111_126 = arith.constant 111 : index
    %203 = vector.load %arg12[%c0_125, %c111_126] : memref<8x512xbf16, #tpu.memory_space<vmem>>, vector<8x256xbf16>
    %204 = vector.broadcast %2 : vector<1x256xbf16> to vector<8x256xbf16>
    %205 = arith.mulf %203, %204 : vector<8x256xbf16>
    %c0_127 = arith.constant 0 : index
    %c0_128 = arith.constant 0 : index
    %206 = vector.load %arg13[%c0_127, %c0_128] : memref<72x256xbf16, #tpu.memory_space<vmem>>, vector<8x256xbf16>
    tpu.vector_store %arg13[%c0_127, %c0_128], %205 {strides = array<i32>} : memref<72x256xbf16, #tpu.memory_space<vmem>>, vector<8x256xbf16>,
    %c0_129 = arith.constant 0 : index
    %c112_130 = arith.constant 112 : index
    %207 = vector.load %arg12[%c0_129, %c112_130] : memref<8x512xbf16, #tpu.memory_space<vmem>>, vector<8x256xbf16>
    %c8_131 = arith.constant 8 : index
    %c0_132 = arith.constant 0 : index
    %208 = vector.load %arg13[%c8_131, %c0_132] : memref<72x256xbf16, #tpu.memory_space<vmem>>, vector<8x256xbf16>
    tpu.vector_store %arg13[%c8_131, %c0_132], %207 {strides = array<i32>} : memref<72x256xbf16, #tpu.memory_space<vmem>>, vector<8x256xbf16>,
    %c0_133 = arith.constant 0 : index
    %c113_134 = arith.constant 113 : index
    %209 = vector.load %arg12[%c0_133, %c113_134] : memref<8x512xbf16, #tpu.memory_space<vmem>>, vector<8x256xbf16>
    %210 = vector.broadcast %3 : vector<1x256xbf16> to vector<8x256xbf16>
    %211 = arith.mulf %209, %210 : vector<8x256xbf16>
    %c16_135 = arith.constant 16 : index
    %c0_136 = arith.constant 0 : index
    %212 = vector.load %arg13[%c16_135, %c0_136] : memref<72x256xbf16, #tpu.memory_space<vmem>>, vector<8x256xbf16>
    tpu.vector_store %arg13[%c16_135, %c0_136], %211 {strides = array<i32>} : memref<72x256xbf16, #tpu.memory_space<vmem>>, vector<8x256xbf16>,
    %c0_137 = arith.constant 0 : index
    %c127_138 = arith.constant 127 : index
    %213 = vector.load %arg12[%c0_137, %c127_138] : memref<8x512xbf16, #tpu.memory_space<vmem>>, vector<8x256xbf16>
    %214 = vector.broadcast %2 : vector<1x256xbf16> to vector<8x256xbf16>
    %215 = arith.mulf %213, %214 : vector<8x256xbf16>
    %c24_139 = arith.constant 24 : index
    %c0_140 = arith.constant 0 : index
    %216 = vector.load %arg13[%c24_139, %c0_140] : memref<72x256xbf16, #tpu.memory_space<vmem>>, vector<8x256xbf16>
    tpu.vector_store %arg13[%c24_139, %c0_140], %215 {strides = array<i32>} : memref<72x256xbf16, #tpu.memory_space<vmem>>, vector<8x256xbf16>,
    %c0_141 = arith.constant 0 : index
    %c128_142 = arith.constant 128 : index
    %217 = vector.load %arg12[%c0_141, %c128_142] : memref<8x512xbf16, #tpu.memory_space<vmem>>, vector<8x256xbf16>
    %c32_143 = arith.constant 32 : index
    %c0_144 = arith.constant 0 : index
    %218 = vector.load %arg13[%c32_143, %c0_144] : memref<72x256xbf16, #tpu.memory_space<vmem>>, vector<8x256xbf16>
    tpu.vector_store %arg13[%c32_143, %c0_144], %217 {strides = array<i32>} : memref<72x256xbf16, #tpu.memory_space<vmem>>, vector<8x256xbf16>,
    %c0_145 = arith.constant 0 : index
    %c129_146 = arith.constant 129 : index
    %219 = vector.load %arg12[%c0_145, %c129_146] : memref<8x512xbf16, #tpu.memory_space<vmem>>, vector<8x256xbf16>
    %220 = vector.broadcast %3 : vector<1x256xbf16> to vector<8x256xbf16>
    %221 = arith.mulf %219, %220 : vector<8x256xbf16>
    %c40_147 = arith.constant 40 : index
    %c0_148 = arith.constant 0 : index
    %222 = vector.load %arg13[%c40_147, %c0_148] : memref<72x256xbf16, #tpu.memory_space<vmem>>, vector<8x256xbf16>
    tpu.vector_store %arg13[%c40_147, %c0_148], %221 {strides = array<i32>} : memref<72x256xbf16, #tpu.memory_space<vmem>>, vector<8x256xbf16>,
    %c0_149 = arith.constant 0 : index
    %c143_150 = arith.constant 143 : index
    %223 = vector.load %arg12[%c0_149, %c143_150] : memref<8x512xbf16, #tpu.memory_space<vmem>>, vector<8x256xbf16>
    %224 = vector.broadcast %2 : vector<1x256xbf16> to vector<8x256xbf16>
    %225 = arith.mulf %223, %224 : vector<8x256xbf16>
    %c48_151 = arith.constant 48 : index
    %c0_152 = arith.constant 0 : index
    %226 = vector.load %arg13[%c48_151, %c0_152] : memref<72x256xbf16, #tpu.memory_space<vmem>>, vector<8x256xbf16>
    tpu.vector_store %arg13[%c48_151, %c0_152], %225 {strides = array<i32>} : memref<72x256xbf16, #tpu.memory_space<vmem>>, vector<8x256xbf16>,
    %c0_153 = arith.constant 0 : index
    %c144_154 = arith.constant 144 : index
    %227 = vector.load %arg12[%c0_153, %c144_154] : memref<8x512xbf16, #tpu.memory_space<vmem>>, vector<8x256xbf16>
    %c56_155 = arith.constant 56 : index
    %c0_156 = arith.constant 0 : index
    %228 = vector.load %arg13[%c56_155, %c0_156] : memref<72x256xbf16, #tpu.memory_space<vmem>>, vector<8x256xbf16>
    tpu.vector_store %arg13[%c56_155, %c0_156], %227 {strides = array<i32>} : memref<72x256xbf16, #tpu.memory_space<vmem>>, vector<8x256xbf16>,
    %c0_157 = arith.constant 0 : index
    %c145_158 = arith.constant 145 : index
    %229 = vector.load %arg12[%c0_157, %c145_158] : memref<8x512xbf16, #tpu.memory_space<vmem>>, vector<8x256xbf16>
    %230 = vector.broadcast %3 : vector<1x256xbf16> to vector<8x256xbf16>
    %231 = arith.mulf %229, %230 : vector<8x256xbf16>
    %c64_159 = arith.constant 64 : index
    %c0_160 = arith.constant 0 : index
    %232 = vector.load %arg13[%c64_159, %c0_160] : memref<72x256xbf16, #tpu.memory_space<vmem>>, vector<8x256xbf16>
    tpu.vector_store %arg13[%c64_159, %c0_160], %231 {strides = array<i32>} : memref<72x256xbf16, #tpu.memory_space<vmem>>, vector<8x256xbf16>,
    %c0_161 = arith.constant 0 : index
    %c0_162 = arith.constant 0 : index
    %233 = vector.load %arg6[%c0_161, %c0_162] : memref<8x72xbf16, #tpu.memory_space<vmem>>, vector<8x72xbf16>
    %c0_163 = arith.constant 0 : index
    %c0_164 = arith.constant 0 : index
    %234 = vector.load %arg13[%c0_163, %c0_164] : memref<72x256xbf16, #tpu.memory_space<vmem>>, vector<72x256xbf16>
    %cst_165 = arith.constant dense<0.000000e+00> : vector<8x256xf32>
    %235 = tpu.matmul %233, %234, %cst_165 {dimension_numbers = #tpu.dot_dimension_numbers<[1], [0], [0], [1], [0, 0, 1, 1], [], []>} : vector<8x72xbf16>, vector<72x256xbf16>, vector<8x256xf32> -> vector<8x256xf32>
    %c0_166 = arith.constant 0 : index
    %c0_167 = arith.constant 0 : index
    %236 = vector.load %arg7[%c0_166, %c0_167] : memref<8x1xf32, #tpu.memory_space<vmem>>, vector<8x1xf32>
    %237 = vector.broadcast %236 : vector<8x1xf32> to vector<8x256xf32>
    %238 = arith.addf %235, %237 : vector<8x256xf32>
    %c0_168 = arith.constant 0 : index
    %c0_169 = arith.constant 0 : index
    %239 = vector.load %arg8[%c0_168, %c0_169] : memref<256x64xf32, #tpu.memory_space<vmem>>, vector<256x64xf32>
    %cst_170 = arith.constant dense<0.000000e+00> : vector<8x64xf32>
    %240 = tpu.matmul %238, %239, %cst_170 {dimension_numbers = #tpu.dot_dimension_numbers<[1], [0], [0], [1], [0, 0, 1, 1], [], []>} : vector<8x256xf32>, vector<256x64xf32>, vector<8x64xf32> -> vector<8x64xf32>
    %c0_171 = arith.constant 0 : index
    %c0_172 = arith.constant 0 : index
    %c0_173 = arith.constant 0 : index
    %241 = vector.load %arg11[%c0_171, %c0_172, %c0_173] : memref<1x8x64xf32, #tpu.memory_space<vmem>>, vector<1x8x64xf32>
    %242 = vector.shape_cast %241 : vector<1x8x64xf32> to vector<8x64xf32>
    %243 = vector.shape_cast %240 : vector<8x64xf32> to vector<1x8x64xf32>
    tpu.vector_store %arg11[%c0_171, %c0_172, %c0_173], %243 {strides = array<i32>} : memref<1x8x64xf32, #tpu.memory_space<vmem>>, vector<1x8x64xf32>,
    return
  }
  func.func @transform_0(%arg0: i32) -> (i32, i32, i32) {
    %c0_i32 = arith.constant 0 : i32
    %c0_i32_0 = arith.constant 0 : i32
    %c0_i32_1 = arith.constant 0 : i32
    return %arg0, %c0_i32, %c0_i32_0 : i32, i32, i32
  }
  func.func @transform_1(%arg0: i32) -> (i32, i32) {
    %c0_i32 = arith.constant 0 : i32
    %c0_i32_0 = arith.constant 0 : i32
    %c0_i32_1 = arith.constant 0 : i32
    return %c0_i32, %c0_i32_0 : i32, i32
  }
  func.func @transform_2(%arg0: i32) -> (i32, i32) {
    %c0_i32 = arith.constant 0 : i32
    %c0_i32_0 = arith.constant 0 : i32
    %c0_i32_1 = arith.constant 0 : i32
    return %c0_i32, %c0_i32_0 : i32, i32
  }
  func.func @transform_3(%arg0: i32) -> (i32, i32) {
    %c0_i32 = arith.constant 0 : i32
    %c0_i32_0 = arith.constant 0 : i32
    %c0_i32_1 = arith.constant 0 : i32
    return %c0_i32, %c0_i32_0 : i32, i32
  }
  func.func @transform_4(%arg0: i32) -> (i32, i32) {
    %c0_i32 = arith.constant 0 : i32
    %c0_i32_0 = arith.constant 0 : i32
    %c0_i32_1 = arith.constant 0 : i32
    return %c0_i32, %c0_i32_0 : i32, i32
  }
  func.func @transform_5(%arg0: i32) -> (i32, i32) {
    %c0_i32 = arith.constant 0 : i32
    %c0_i32_0 = arith.constant 0 : i32
    %c0_i32_1 = arith.constant 0 : i32
    return %c0_i32, %c0_i32_0 : i32, i32
  }
  func.func @transform_6(%arg0: i32) -> (i32, i32) {
    %c0_i32 = arith.constant 0 : i32
    %c0_i32_0 = arith.constant 0 : i32
    %c0_i32_1 = arith.constant 0 : i32
    return %c0_i32, %c0_i32_0 : i32, i32
  }
  func.func @transform_7(%arg0: i32) -> (i32, i32) {
    %c0_i32 = arith.constant 0 : i32
    %c0_i32_0 = arith.constant 0 : i32
    %c0_i32_1 = arith.constant 0 : i32
    return %c0_i32, %c0_i32_0 : i32, i32
  }
  func.func @transform_8(%arg0: i32) -> (i32, i32) {
    %c0_i32 = arith.constant 0 : i32
    %c0_i32_0 = arith.constant 0 : i32
    %c0_i32_1 = arith.constant 0 : i32
    return %c0_i32, %c0_i32_0 : i32, i32
  }
  func.func @transform_9(%arg0: i32) -> (i32, i32, i32) {
    %c0_i32 = arith.constant 0 : i32
    %c0_i32_0 = arith.constant 0 : i32
    %c0_i32_1 = arith.constant 0 : i32
    return %arg0, %c0_i32, %c0_i32_0 : i32, i32, i32
  }
  func.func @transform_10(%arg0: i32) -> (i32, i32, i32) {
    %c0_i32 = arith.constant 0 : i32
    %c0_i32_0 = arith.constant 0 : i32
    %c0_i32_1 = arith.constant 0 : i32
    return %arg0, %c0_i32, %c0_i32_0 : i32, i32, i32
  }
}

</mosaic_0001>

<llo_original>
// kernel: ginka_encoder.1
$region0: #{ginka_encoder.1}
  #allocation0 [shape = 'u32[]', space=smem, size = 0x4, offset = 0x4, fixed_abs, tag = 'smem constant byte address 0x4 - core index']
  #allocation1 [shape = 'u32[144,128]{1,0:T(1,128)}', space=vmem, size = 0x12000, scoped, tag = 'internal scratch']
  #allocation2 [shape = 'bf16[8,512]{1,0:T(8,128)(2,1)}', space=vmem, size = 0x2000, scoped, tag = 'scratch operand']
  #allocation3 [shape = 'bf16[72,256]{1,0:T(8,128)(2,1)}', space=vmem, size = 0x9000, scoped, tag = 'scratch operand']
  %s0 = inlined_call_operand.vmem [shape: f32[2,4,256], index: 0, kind: input, shape index: {}]
  %s1 = inlined_call_operand.vmem [shape: bf16[8,72], index: 1, kind: input, shape index: {}]
  %s2 = inlined_call_operand.vmem [shape: f32[8,1], index: 2, kind: input, shape index: {}]
  %s3 = inlined_call_operand.vmem [shape: bf16[8,72], index: 3, kind: input, shape index: {}]
  %s4 = inlined_call_operand.vmem [shape: f32[8,1], index: 4, kind: input, shape index: {}]
  %s5 = inlined_call_operand.vmem [shape: bf16[8,72], index: 5, kind: input, shape index: {}]
  %s6 = inlined_call_operand.vmem [shape: f32[8,1], index: 6, kind: input, shape index: {}]
  %s7 = inlined_call_operand.vmem [shape: f32[256,64], index: 7, kind: input, shape index: {}]
  %s8 = inlined_call_operand.vmem [shape: bf16[2,256], index: 8, kind: input, shape index: {}]
  %s9 = inlined_call_operand.vmem [shape: f32[2,8,256], index: 9, kind: output, shape index: {0}]
  %s10 = inlined_call_operand.vmem [shape: f32[2,8,64], index: 10, kind: output, shape index: {1}]
  %11 = xla_tuple %s9, %s10
  %s12 = sld [smem:[#allocation0]]
  $region77: #{ginka_encoder.1} parent=0
    _
  %s14 = ssub.s32 1, %s12
  %s15 = scalar_select 0, %s14, %s12
  loop: start=0, step=1, limit=4
  $region2: #{ginka_encoder.1} parent=0 // loop_pre_header
    _
  $region3: #{ginka_encoder.1} parent=0 // loop_header
    %s17 = sphi 0, %s21
    %p18 = scmp.ge.s32.totalorder %s17, 4
    %s27 = sphi 0, %s29
    %s30 = sphi 0, %s27
    %s31 = sphi 0, %s30
    %s47 = sphi 0, %s31
    %s51 = sphi 0, %s51
    %s53 = sphi 0, %s51
    %s54 = sphi 0, %s53
    %s68 = sphi 0, %s54
    %s72 = sphi 0, %s72
    %s74 = sphi 0, %s72
    %s75 = sphi 0, %s74
    %s89 = sphi 0, %s75
    %s93 = sphi 0, %s93
    %s95 = sphi 0, %s93
    %s96 = sphi 0, %s95
    %s110 = sphi 0, %s96
    %s114 = sphi 0, %s114
    %s116 = sphi 0, %s114
    %s117 = sphi 0, %s116
    %s131 = sphi 0, %s117
    %s135 = sphi 0, %s135
    %s137 = sphi 0, %s135
    %s138 = sphi 0, %s137
    %s152 = sphi 0, %s138
    %s156 = sphi 0, %s156
    %s158 = sphi 0, %s156
    %s159 = sphi 0, %s158
    %s173 = sphi 0, %s159
    %s177 = sphi 0, %s177
    %s179 = sphi 0, %s177
    %s180 = sphi 0, %s179
    %s194 = sphi 0, %s180
    %s198 = sphi 0, %s198
    %s200 = sphi 0, %s198
    %s201 = sphi 0, %s200
    %s215 = sphi 0, %s201
    %s221 = sphi 0, %s223
    %s224 = sphi 0, %s221
    %s225 = sphi 0, %s224
    %s241 = sphi 0, %s225
    %s247 = sphi 0, %s249
    %s250 = sphi 0, %s247
    %s251 = sphi 0, %s250
    %s267 = sphi 0, %s251
  $region4: #{ginka_encoder.1} parent=0 // loop_header_branch
    %20 = sbr.rel (%p18) target = $region8
  $region5: #{ginka_encoder.1} parent=0 // loop_body
    %s22 = ssub.s32 %s17, 1
    %s23 = ssub.s32 %s17, 2
    %s24 = sadd.s32 %s17, 1
    %s25 = ssub.s32 %s17, %s24
    %p26 = scmp.eq.s32.totalorder %s25, 0
    %s28 = sadd.s32 %s27, 1
    %s29 = scalar_select %p26, %s27, %s28
    %p32 = pneg %p26
    %p33 = scmp.eq.s32.totalorder %s17, 1
    %p34 = por %p32, %p33
    %p35 = scmp.ne.s32.totalorder %s27, %s30
    %p36 = scmp.eq.s32.totalorder %s17, 0
    %p37 = por %p35, %p36
    %p38 = scmp.ne.s32.totalorder %s27, %s30
    %p39 = scmp.eq.s32.totalorder %s22, 1
    %p40 = por %p38, %p39
    %p41 = scmp.ne.s32.totalorder %s30, %s31
    %p42 = scmp.eq.s32.totalorder %s22, 0
    %p43 = por %p41, %p42
    %p44 = scmp.ne.s32.totalorder %s30, %s31
    %p45 = scmp.eq.s32.totalorder %s23, 1
    %p46 = por %p44, %p45
    %p48 = scmp.ne.s32.totalorder %s31, %s47
    %p49 = scmp.eq.s32.totalorder %s23, 0
    %p50 = por %p48, %p49
    %s52 = sadd.s32 %s51, 1
    %p55 = scmp.eq.s32.totalorder %s17, 1
    %p56 = scmp.ne.s32.totalorder %s51, %s53
    %p57 = scmp.eq.s32.totalorder %s17, 0
    %p58 = por %p56, %p57
    %p59 = scmp.ne.s32.totalorder %s51, %s53
    %p60 = scmp.eq.s32.totalorder %s22, 1
    %p61 = por %p59, %p60
    %p62 = scmp.ne.s32.totalorder %s53, %s54
    %p63 = scmp.eq.s32.totalorder %s22, 0
    %p64 = por %p62, %p63
    %p65 = scmp.ne.s32.totalorder %s53, %s54
    %p66 = scmp.eq.s32.totalorder %s23, 1
    %p67 = por %p65, %p66
    %p69 = scmp.ne.s32.totalorder %s54, %s68
    %p70 = scmp.eq.s32.totalorder %s23, 0
    %p71 = por %p69, %p70
    %s73 = sadd.s32 %s72, 1
    %p76 = scmp.eq.s32.totalorder %s17, 1
    %p77 = scmp.ne.s32.totalorder %s72, %s74
    %p78 = scmp.eq.s32.totalorder %s17, 0
    %p79 = por %p77, %p78
    %p80 = scmp.ne.s32.totalorder %s72, %s74
    %p81 = scmp.eq.s32.totalorder %s22, 1
    %p82 = por %p80, %p81
    %p83 = scmp.ne.s32.totalorder %s74, %s75
    %p84 = scmp.eq.s32.totalorder %s22, 0
    %p85 = por %p83, %p84
    %p86 = scmp.ne.s32.totalorder %s74, %s75
    %p87 = scmp.eq.s32.totalorder %s23, 1
    %p88 = por %p86, %p87
    %p90 = scmp.ne.s32.totalorder %s75, %s89
    %p91 = scmp.eq.s32.totalorder %s23, 0
    %p92 = por %p90, %p91
    %s94 = sadd.s32 %s93, 1
    %p97 = scmp.eq.s32.totalorder %s17, 1
    %p98 = scmp.ne.s32.totalorder %s93, %s95
    %p99 = scmp.eq.s32.totalorder %s17, 0
    %p100 = por %p98, %p99
    %p101 = scmp.ne.s32.totalorder %s93, %s95
    %p102 = scmp.eq.s32.totalorder %s22, 1
    %p103 = por %p101, %p102
    %p104 = scmp.ne.s32.totalorder %s95, %s96
    %p105 = scmp.eq.s32.totalorder %s22, 0
    %p106 = por %p104, %p105
    %p107 = scmp.ne.s32.totalorder %s95, %s96
    %p108 = scmp.eq.s32.totalorder %s23, 1
    %p109 = por %p107, %p108
    %p111 = scmp.ne.s32.totalorder %s96, %s110
    %p112 = scmp.eq.s32.totalorder %s23, 0
    %p113 = por %p111, %p112
    %s115 = sadd.s32 %s114, 1
    %p118 = scmp.eq.s32.totalorder %s17, 1
    %p119 = scmp.ne.s32.totalorder %s114, %s116
    %p120 = scmp.eq.s32.totalorder %s17, 0
    %p121 = por %p119, %p120
    %p122 = scmp.ne.s32.totalorder %s114, %s116
    %p123 = scmp.eq.s32.totalorder %s22, 1
    %p124 = por %p122, %p123
    %p125 = scmp.ne.s32.totalorder %s116, %s117
    %p126 = scmp.eq.s32.totalorder %s22, 0
    %p127 = por %p125, %p126
    %p128 = scmp.ne.s32.totalorder %s116, %s117
    %p129 = scmp.eq.s32.totalorder %s23, 1
    %p130 = por %p128, %p129
    %p132 = scmp.ne.s32.totalorder %s117, %s131
    %p133 = scmp.eq.s32.totalorder %s23, 0
    %p134 = por %p132, %p133
    %s136 = sadd.s32 %s135, 1
    %p139 = scmp.eq.s32.totalorder %s17, 1
    %p140 = scmp.ne.s32.totalorder %s135, %s137
    %p141 = scmp.eq.s32.totalorder %s17, 0
    %p142 = por %p140, %p141
    %p143 = scmp.ne.s32.totalorder %s135, %s137
    %p144 = scmp.eq.s32.totalorder %s22, 1
    %p145 = por %p143, %p144
    %p146 = scmp.ne.s32.totalorder %s137, %s138
    %p147 = scmp.eq.s32.totalorder %s22, 0
    %p148 = por %p146, %p147
    %p149 = scmp.ne.s32.totalorder %s137, %s138
    %p150 = scmp.eq.s32.totalorder %s23, 1
    %p151 = por %p149, %p150
    %p153 = scmp.ne.s32.totalorder %s138, %s152
    %p154 = scmp.eq.s32.totalorder %s23, 0
    %p155 = por %p153, %p154
    %s157 = sadd.s32 %s156, 1
    %p160 = scmp.eq.s32.totalorder %s17, 1
    %p161 = scmp.ne.s32.totalorder %s156, %s158
    %p162 = scmp.eq.s32.totalorder %s17, 0
    %p163 = por %p161, %p162
    %p164 = scmp.ne.s32.totalorder %s156, %s158
    %p165 = scmp.eq.s32.totalorder %s22, 1
    %p166 = por %p164, %p165
    %p167 = scmp.ne.s32.totalorder %s158, %s159
    %p168 = scmp.eq.s32.totalorder %s22, 0
    %p169 = por %p167, %p168
    %p170 = scmp.ne.s32.totalorder %s158, %s159
    %p171 = scmp.eq.s32.totalorder %s23, 1
    %p172 = por %p170, %p171
    %p174 = scmp.ne.s32.totalorder %s159, %s173
    %p175 = scmp.eq.s32.totalorder %s23, 0
    %p176 = por %p174, %p175
    %s178 = sadd.s32 %s177, 1
    %p181 = scmp.eq.s32.totalorder %s17, 1
    %p182 = scmp.ne.s32.totalorder %s177, %s179
    %p183 = scmp.eq.s32.totalorder %s17, 0
    %p184 = por %p182, %p183
    %p185 = scmp.ne.s32.totalorder %s177, %s179
    %p186 = scmp.eq.s32.totalorder %s22, 1
    %p187 = por %p185, %p186
    %p188 = scmp.ne.s32.totalorder %s179, %s180
    %p189 = scmp.eq.s32.totalorder %s22, 0
    %p190 = por %p188, %p189
    %p191 = scmp.ne.s32.totalorder %s179, %s180
    %p192 = scmp.eq.s32.totalorder %s23, 1
    %p193 = por %p191, %p192
    %p195 = scmp.ne.s32.totalorder %s180, %s194
    %p196 = scmp.eq.s32.totalorder %s23, 0
    %p197 = por %p195, %p196
    %s199 = sadd.s32 %s198, 1
    %p202 = scmp.eq.s32.totalorder %s17, 1
    %p203 = scmp.ne.s32.totalorder %s198, %s200
    %p204 = scmp.eq.s32.totalorder %s17, 0
    %p205 = por %p203, %p204
    %p206 = scmp.ne.s32.totalorder %s198, %s200
    %p207 = scmp.eq.s32.totalorder %s22, 1
    %p208 = por %p206, %p207
    %p209 = scmp.ne.s32.totalorder %s200, %s201
    %p210 = scmp.eq.s32.totalorder %s22, 0
    %p211 = por %p209, %p210
    %p212 = scmp.ne.s32.totalorder %s200, %s201
    %p213 = scmp.eq.s32.totalorder %s23, 1
    %p214 = por %p212, %p213
    %p216 = scmp.ne.s32.totalorder %s201, %s215
    %p217 = scmp.eq.s32.totalorder %s23, 0
    %p218 = por %p216, %p217
    %s219 = ssub.s32 %s17, %s24
    %p220 = scmp.eq.s32.totalorder %s219, 0
    %s222 = sadd.s32 %s221, 1
    %s223 = scalar_select %p220, %s221, %s222
    %p226 = pneg %p220
    %p227 = scmp.eq.s32.totalorder %s17, 1
    %p228 = por %p226, %p227
    %p229 = scmp.ne.s32.totalorder %s221, %s224
    %p230 = scmp.eq.s32.totalorder %s17, 0
    %p231 = por %p229, %p230
    %p232 = scmp.ne.s32.totalorder %s221, %s224
    %p233 = scmp.eq.s32.totalorder %s22, 1
    %p234 = por %p232, %p233
    %p235 = scmp.ne.s32.totalorder %s224, %s225
    %p236 = scmp.eq.s32.totalorder %s22, 0
    %p237 = por %p235, %p236
    %p238 = scmp.ne.s32.totalorder %s224, %s225
    %p239 = scmp.eq.s32.totalorder %s23, 1
    %p240 = por %p238, %p239
    %p242 = scmp.ne.s32.totalorder %s225, %s241
    %p243 = scmp.eq.s32.totalorder %s23, 0
    %p244 = por %p242, %p243
    %s245 = ssub.s32 %s17, %s24
    %p246 = scmp.eq.s32.totalorder %s245, 0
    %s248 = sadd.s32 %s247, 1
    %s249 = scalar_select %p246, %s247, %s248
    %p252 = pneg %p246
    %p253 = scmp.eq.s32.totalorder %s17, 1
    %p254 = por %p252, %p253
    %p255 = scmp.ne.s32.totalorder %s247, %s250
    %p256 = scmp.eq.s32.totalorder %s17, 0
    %p257 = por %p255, %p256
    %p258 = scmp.ne.s32.totalorder %s247, %s250
    %p259 = scmp.eq.s32.totalorder %s22, 1
    %p260 = por %p258, %p259
    %p261 = scmp.ne.s32.totalorder %s250, %s251
    %p262 = scmp.eq.s32.totalorder %s22, 0
    %p263 = por %p261, %p262
    %p264 = scmp.ne.s32.totalorder %s250, %s251
    %p265 = scmp.eq.s32.totalorder %s23, 1
    %p266 = por %p264, %p265
    %p268 = scmp.ne.s32.totalorder %s251, %s267
    %p269 = scmp.eq.s32.totalorder %s23, 0
    %p270 = por %p268, %p269
    %p271 = scmp.le.s32.totalorder 1, %s17
    %p272 = scmp.lt.s32.totalorder %s17, 3
    %p273 = pnand %p271, %p272
    %p274 = pneg %p273
    // Predicated region
    $region9: #{ginka_encoder.1} parent=5 // pred_check
      _
    $region10: #{ginka_encoder.1} parent=5 // pred_check_branch
      %276 = sbr.rel (%p273) target = $region12
    $region11: #{ginka_encoder.1} parent=5 // pred_region
      %s277 = ssub.s32 %s17, 1
      // Predicated region
      $region13: #{ginka_encoder.1} parent=11 // pred_check
        %p278 = pneg %p64
      $region14: #{ginka_encoder.1} parent=11 // pred_check_branch
        %280 = sbr.rel (%p278) target = $region16
      $region15: #{ginka_encoder.1} parent=11 // pred_region
        _
      $region16: #{ginka_encoder.1} parent=11 // pred_fallthru
        _
      // Predicated region
      $region17: #{ginka_encoder.1} parent=11 // pred_check
        %p281 = pneg %p85
      $region18: #{ginka_encoder.1} parent=11 // pred_check_branch
        %283 = sbr.rel (%p281) target = $region20
      $region19: #{ginka_encoder.1} parent=11 // pred_region
        _
      $region20: #{ginka_encoder.1} parent=11 // pred_fallthru
        _
      // Predicated region
      $region21: #{ginka_encoder.1} parent=11 // pred_check
        %p284 = pneg %p106
      $region22: #{ginka_encoder.1} parent=11 // pred_check_branch
        %286 = sbr.rel (%p284) target = $region24
      $region23: #{ginka_encoder.1} parent=11 // pred_region
        _
      $region24: #{ginka_encoder.1} parent=11 // pred_fallthru
        _
      // Predicated region
      $region25: #{ginka_encoder.1} parent=11 // pred_check
        %p287 = pneg %p127
      $region26: #{ginka_encoder.1} parent=11 // pred_check_branch
        %289 = sbr.rel (%p287) target = $region28
      $region27: #{ginka_encoder.1} parent=11 // pred_region
        _
      $region28: #{ginka_encoder.1} parent=11 // pred_fallthru
        _
      // Predicated region
      $region29: #{ginka_encoder.1} parent=11 // pred_check
        %p290 = pneg %p148
      $region30: #{ginka_encoder.1} parent=11 // pred_check_branch
        %292 = sbr.rel (%p290) target = $region32
      $region31: #{ginka_encoder.1} parent=11 // pred_region
        _
      $region32: #{ginka_encoder.1} parent=11 // pred_fallthru
        _
      // Predicated region
      $region33: #{ginka_encoder.1} parent=11 // pred_check
        %p293 = pneg %p169
      $region34: #{ginka_encoder.1} parent=11 // pred_check_branch
        %295 = sbr.rel (%p293) target = $region36
      $region35: #{ginka_encoder.1} parent=11 // pred_region
        _
      $region36: #{ginka_encoder.1} parent=11 // pred_fallthru
        _
      // Predicated region
      $region37: #{ginka_encoder.1} parent=11 // pred_check
        %p296 = pneg %p190
      $region38: #{ginka_encoder.1} parent=11 // pred_check_branch
        %298 = sbr.rel (%p296) target = $region40
      $region39: #{ginka_encoder.1} parent=11 // pred_region
        _
      $region40: #{ginka_encoder.1} parent=11 // pred_fallthru
        _
      // Predicated region
      $region41: #{ginka_encoder.1} parent=11 // pred_check
        %p299 = pneg %p211
      $region42: #{ginka_encoder.1} parent=11 // pred_check_branch
        %301 = sbr.rel (%p299) target = $region44
      $region43: #{ginka_encoder.1} parent=11 // pred_region
        _
      $region44: #{ginka_encoder.1} parent=11 // pred_fallthru
        _
    $region12: #{ginka_encoder.1} parent=5 // pred_fallthru
      _
    %p302 = scmp.lt.s32.totalorder %s17, 2
    // Predicated region
    $region45: #{ginka_encoder.1} parent=5 // pred_check
      %p303 = pneg %p302
    $region46: #{ginka_encoder.1} parent=5 // pred_check_branch
      %305 = sbr.rel (%p303) target = $region48
    $region47: #{ginka_encoder.1} parent=5 // pred_region
      // Predicated region
      $region49: #{ginka_encoder.1} parent=47 // pred_check
        %p306 = pneg %p37
      $region50: #{ginka_encoder.1} parent=47 // pred_check_branch
        %308 = sbr.rel (%p306) target = $region52
      $region51: #{ginka_encoder.1} parent=47 // pred_region
        %p309 = scmp.lt.s32.totalorder %s17, 1
        %s310 = scalar_select %p309, %s17, 1
        %s311 = smul.addr %s310, 2
        %s312 = smul.addr %s311, 4
        %s313 = scalar_lea.vmem %s0, %s312
      $region52: #{ginka_encoder.1} parent=47 // pred_fallthru
        _
    $region48: #{ginka_encoder.1} parent=5 // pred_fallthru
      _
    %p314 = scmp.le.s32.totalorder 1, %s17
    %p315 = scmp.lt.s32.totalorder %s17, 3
    %p316 = pnand %p314, %p315
    %p317 = pneg %p316
    // Predicated region
    $region53: #{ginka_encoder.1} parent=5 // pred_check
      _
    $region54: #{ginka_encoder.1} parent=5 // pred_check_branch
      %319 = sbr.rel (%p316) target = $region56
    $region55: #{ginka_encoder.1} parent=5 // pred_region
      %s320 = ssub.s32 %s17, 1
      %p321 = scmp.lt.s32.totalorder %s22, 1
      %s322 = scalar_select %p321, %s22, 1
      %s323 = smul.addr %s322, 2
      %s324 = smul.addr %s323, 4
      %s325 = scalar_lea.vmem %s0, %s324
      %p326 = pneg %p43
      %p327 = pneg %p40
      %p328 = pneg %p64
      %p329 = pneg %p61
      %p330 = pneg %p85
      %p331 = pneg %p82
      %p332 = pneg %p106
      %p333 = pneg %p103
      %p334 = pneg %p127
      %p335 = pneg %p124
      %p336 = pneg %p148
      %p337 = pneg %p145
      %p338 = pneg %p169
      %p339 = pneg %p166
      %p340 = pneg %p190
      %p341 = pneg %p187
      %p342 = pneg %p211
      %p343 = pneg %p208
      %p344 = pneg %p237
      %p345 = pneg %p234
      %p346 = scmp.lt.s32.totalorder %s22, 1
      %s347 = scalar_select %p346, %s22, 1
      %s348 = smul.addr %s347, 2
      %s349 = smul.addr %s348, 8
      %s350 = scalar_lea.vmem %s9, %s349
      %p351 = pneg %p263
      %p352 = pneg %p260
      %p353 = scmp.lt.s32.totalorder %s22, 1
      %s354 = scalar_select %p353, %s22, 1
      %s355 = smul.addr %s354, 8
      %s356 = scalar_lea.vmem %s10, %s355
      %p357 = scmp.lt.s32.totalorder %s22, 1
      %s358 = scalar_select %p357, %s22, 1
      %s359 = smul.addr %s358, 2
      %s360 = smul.addr %s359, 4
      %s361 = scalar_lea.vmem %s0, %s360
      %p362 = scmp.lt.s32.totalorder %s22, 1
      %s363 = scalar_select %p362, %s22, 1
      %s364 = smul.addr %s363, 2
      %s365 = smul.addr %s364, 8
      %s366 = scalar_lea.vmem %s9, %s365
      %p367 = scmp.lt.s32.totalorder %s22, 1
      %s368 = scalar_select %p367, %s22, 1
      %s369 = smul.addr %s368, 8
      %s370 = scalar_lea.vmem %s10, %s369
      %372 = vst [vmem:[#allocation2] sm:$0xff] 0
      %373 = vst [vmem:[#allocation2 + $0x8] sm:$0xff] 0
      %v374 = vld [vmem:[%s8] sm:$0x3]
      %v375 = vld [vmem:[%s361] sm:$0xff]
      %v377 = vcombine.high %v375, %v375
      %v379 = vpack.c.bf16 %v375, %v375
      %v380 = vpack.c.bf16 %v377, %v377
      %v383 = vunpack.c.l.b16 %v379
      %v384 = vunpack.c.l.b16 %v380
      %v385 = vpack.c.b16 %v384, %v383
      %387 = vst [vmem:[#allocation2 + $0x4] sm:$0x33] %v385
      %v388 = vld [vmem:[#allocation2] sm:$0xff]
      %v389 = vld [vmem:[#allocation2 + $0x8] sm:$0xf]
      %v392 = vunpack.c.l.s4 1966171168
      %v393 = vunpack.c.0.s8 %v392
      %v394 = vlaneseq
      %v395 = vshrl.u32 %v394, 7
      %v396 = vsub.s32 %v393, %v395
      %v397 = vrot.slane %v374, %v396
      %v398 = vcombine.high %v397, %v397
      %v400 = vunpack.c.l.s4 1966171168
      %v401 = vunpack.c.0.s8 %v400
      %v402 = vlaneseq
      %v403 = vshrl.u32 %v402, 7
      %v404 = vsub.s32 %v401, %v403
      %v405 = vrot.slane %v397, %v404
      %v407 = vunpack.c.l.s4 1966171168
      %v408 = vunpack.c.0.s8 %v407
      %v409 = vlaneseq
      %v410 = vshrl.u32 %v409, 7
      %v411 = vsub.s32 %v408, %v410
      %v412 = vrot.slane %v398, %v411
      %v414 = vpack.i.b16 %v405, %v405
      %v416 = vlaneseq
      %v417 = vshrl.u32 %v416, 7
      %v418 = vsub.s32 0, %v417
      %v419 = vrot.slane %v414, %v418
      %v421 = vpack.i.b16 %v412, %v412
      %v423 = vlaneseq
      %v424 = vshrl.u32 %v423, 7
      %v425 = vsub.s32 0, %v424
      %v426 = vrot.slane %v421, %v425
      %v429 = vunpack.c.l.b16 %v419
      %v430 = vunpack.c.l.b16 %v426
      %v431 = vpack.c.b16 %v430, %v429
      %432 = vrot.lane.b32.xlu0 %v431, 111
      %v433 = vpop.permute.xlu0 %432
      %v434 = vrot.slane %v433, 4
      %vm435 = vcmask 908288
      %v436 = vsel %vm435, %v434, %v433
      %v439 = vmul.bf16 %v388, %v436
      %v440 = vmul.bf16 %v389, %v434
      %443 = vrot.lane.b32.xlu0 %v439, 17
      %v444 = vpop.permute.xlu0 %443
      %445 = vrot.lane.b32.xlu0 %v440, 17
      %v446 = vpop.permute.xlu0 %445
      %v447 = vrot.slane %v444, 4
      %v448 = vrot.slane %v446, 4
      %vm449 = vcmask 1043456
      %v450 = vsel %vm449, %v447, %v448
      %vm451 = vcmask 138240
      %v452 = vsel %vm451, %v444, %v450
      %454 = vst [vmem:[#allocation3] sm:$0xff] %v452
      %v455 = vld [vmem:[#allocation2] sm:$0xff]
      %v456 = vld [vmem:[#allocation2 + $0x8] sm:$0xf]
      %459 = vrot.lane.b32.xlu0 %v455, 16
      %v460 = vpop.permute.xlu0 %459
      %461 = vrot.lane.b32.xlu0 %v456, 16
      %v462 = vpop.permute.xlu0 %461
      %v463 = vrot.slane %v460, 4
      %v464 = vrot.slane %v462, 4
      %v465 = vsel %vm449, %v463, %v464
      %vm466 = vcmask 130048
      %v467 = vsel %vm466, %v460, %v465
      %469 = vst [vmem:[#allocation3 + $0x8] sm:$0xff] %v467
      %v470 = vld [vmem:[#allocation2] sm:$0xff]
      %v471 = vld [vmem:[#allocation2 + $0x8] sm:$0xf]
      %v472 = vshrl.u32 %v405, 16
      %v473 = vpack.i.b16 %v472, %v472
      %v475 = vlaneseq
      %v476 = vshrl.u32 %v475, 7
      %v477 = vsub.s32 0, %v476
      %v478 = vrot.slane %v473, %v477
      %v479 = vshrl.u32 %v412, 16
      %v480 = vpack.i.b16 %v479, %v479
      %v482 = vlaneseq
      %v483 = vshrl.u32 %v482, 7
      %v484 = vsub.s32 0, %v483
      %v485 = vrot.slane %v480, %v484
      %v488 = vunpack.c.l.b16 %v478
      %v489 = vunpack.c.l.b16 %v485
      %v490 = vpack.c.b16 %v489, %v488
      %491 = vrot.lane.b32.xlu0 %v490, 113
      %v492 = vpop.permute.xlu0 %491
      %v493 = vrot.slane %v492, 4
      %vm494 = vcmask 924672
      %v495 = vsel %vm494, %v493, %v492
      %v498 = vmul.bf16 %v470, %v495
      %v499 = vmul.bf16 %v471, %v493
      %502 = vrot.lane.b32.xlu0 %v498, 15
      %v503 = vpop.permute.xlu0 %502
      %504 = vrot.lane.b32.xlu0 %v499, 15
      %v505 = vpop.permute.xlu0 %504
      %v506 = vrot.slane %v503, 4
      %v507 = vrot.slane %v505, 4
      %v508 = vsel %vm449, %v506, %v507
      %vm509 = vcmask 121856
      %v510 = vsel %vm509, %v503, %v508
      %512 = vst [vmem:[#allocation3 + $0x10] sm:$0xff] %v510
      %v513 = vld [vmem:[#allocation2] sm:$0xff]
      %v514 = vld [vmem:[#allocation2 + $0x8] sm:$0xf]
      %515 = vrot.lane.b32.xlu0 %v431, 127
      %v516 = vpop.permute.xlu0 %515
      %v517 = vrot.slane %v516, 4
      %vm518 = vcmask 1039360
      %v519 = vsel %vm518, %v517, %v516
      %v522 = vmul.bf16 %v513, %v519
      %v523 = vmul.bf16 %v514, %v517
      %526 = vrot.lane.b32.xlu0 %v522, 1
      %v527 = vpop.permute.xlu0 %526
      %528 = vrot.lane.b32.xlu0 %v523, 1
      %v529 = vpop.permute.xlu0 %528
      %v530 = vrot.slane %v527, 4
      %v531 = vrot.slane %v529, 4
      %v532 = vsel %vm449, %v530, %v531
      %vm533 = vcmask 7168
      %v534 = vsel %vm533, %v527, %v532
      %536 = vst [vmem:[#allocation3 + $0x18] sm:$0xff] %v534
      %v537 = vld [vmem:[#allocation2 + $0x4] sm:$0xff]
      %538 = vst [vmem:[#allocation3 + $0x20] sm:$0xff] %v537
      %v539 = vld [vmem:[#allocation2 + $0x4] sm:$0xff]
      %v540 = vld [vmem:[#allocation2 + $0xc] sm:$0xf]
      %541 = vrot.lane.b32.xlu0 %v490, 1
      %v542 = vpop.permute.xlu0 %541
      %v543 = vrot.slane %v542, 4
      %v544 = vsel %vm533, %v543, %v542
      %v547 = vmul.bf16 %v539, %v544
      %v548 = vmul.bf16 %v540, %v543
      %551 = vrot.lane.b32.xlu0 %v547, 127
      %v552 = vpop.permute.xlu0 %551
      %553 = vrot.lane.b32.xlu0 %v548, 127
      %v554 = vpop.permute.xlu0 %553
      %v555 = vrot.slane %v552, 4
      %v556 = vrot.slane %v554, 4
      %v557 = vsel %vm449, %v555, %v556
      %v558 = vsel %vm518, %v552, %v557
      %560 = vst [vmem:[#allocation3 + $0x28] sm:$0xff] %v558
      %v561 = vld [vmem:[#allocation2 + $0x4] sm:$0xff]
      %v562 = vld [vmem:[#allocation2 + $0xc] sm:$0xf]
      %563 = vrot.lane.b32.xlu0 %v431, 15
      %v564 = vpop.permute.xlu0 %563
      %v565 = vrot.slane %v564, 4
      %v566 = vsel %vm509, %v565, %v564
      %v569 = vmul.bf16 %v561, %v566
      %v570 = vmul.bf16 %v562, %v565
      %573 = vrot.lane.b32.xlu0 %v569, 113
      %v574 = vpop.permute.xlu0 %573
      %575 = vrot.lane.b32.xlu0 %v570, 113
      %v576 = vpop.permute.xlu0 %575
      %v577 = vrot.slane %v574, 4
      %v578 = vrot.slane %v576, 4
      %v579 = vsel %vm449, %v577, %v578
      %v580 = vsel %vm494, %v574, %v579
      %582 = vst [vmem:[#allocation3 + $0x30] sm:$0xff] %v580
      %v583 = vld [vmem:[#allocation2 + $0x4] sm:$0xff]
      %v584 = vld [vmem:[#allocation2 + $0xc] sm:$0xf]
      %587 = vrot.lane.b32.xlu0 %v583, 112
      %v588 = vpop.permute.xlu0 %587
      %589 = vrot.lane.b32.xlu0 %v584, 112
      %v590 = vpop.permute.xlu0 %589
      %v591 = vrot.slane %v588, 4
      %v592 = vrot.slane %v590, 4
      %v593 = vsel %vm449, %v591, %v592
      %vm594 = vcmask 916480
      %v595 = vsel %vm594, %v588, %v593
      %597 = vst [vmem:[#allocation3 + $0x38] sm:$0xff] %v595
      %v598 = vld [vmem:[#allocation2 + $0x4] sm:$0xff]
      %v599 = vld [vmem:[#allocation2 + $0xc] sm:$0xf]
      %600 = vrot.lane.b32.xlu0 %v490, 17
      %v601 = vpop.permute.xlu0 %600
      %v602 = vrot.slane %v601, 4
      %v603 = vsel %vm451, %v602, %v601
      %v606 = vmul.bf16 %v598, %v603
      %v607 = vmul.bf16 %v599, %v602
      %610 = vrot.lane.b32.xlu0 %v606, 111
      %v611 = vpop.permute.xlu0 %610
      %612 = vrot.lane.b32.xlu0 %v607, 111
      %v613 = vpop.permute.xlu0 %612
      %v614 = vrot.slane %v611, 4
      %v615 = vrot.slane %v613, 4
      %v616 = vsel %vm449, %v614, %v615
      %v617 = vsel %vm435, %v611, %v616
      %619 = vst [vmem:[#allocation3 + $0x40] sm:$0xff] %v617
      %v620 = vld [vmem:[%s1] sm:$0xf]
      %v621 = vld [vmem:[#allocation3] sm:$0xff]
      %v622 = vld [vmem:[#allocation3 + $0x8] sm:$0xff]
      %v623 = vld [vmem:[#allocation3 + $0x10] sm:$0xff]
      %v624 = vld [vmem:[#allocation3 + $0x18] sm:$0xff]
      %v625 = vld [vmem:[#allocation3 + $0x20] sm:$0xff]
      %v626 = vld [vmem:[#allocation3 + $0x28] sm:$0xff]
      %v627 = vld [vmem:[#allocation3 + $0x30] sm:$0xff]
      %v628 = vld [vmem:[#allocation3 + $0x38] sm:$0xff]
      %v629 = vld [vmem:[#allocation3 + $0x40] sm:$0xff]
      %v630 = vld [vmem:[%s2] sm:$0xff]
      %632 = vset.pattern.permute.xlu0 0
      %633 = vperm.xlu0 %632, %v630
      %v634 = vpop.permute.xlu0 %633
      %v645 = vunpack.c.l.b16 %v621
      %v646 = vunpack.c.h.b16 %v621
      %v647 = vunpack.c.l.b16 %v622
      %v648 = vunpack.c.h.b16 %v622
      %v649 = vunpack.c.l.b16 %v623
      %v650 = vunpack.c.h.b16 %v623
      %v651 = vunpack.c.l.b16 %v624
      %v652 = vunpack.c.h.b16 %v624
      %v653 = vunpack.c.l.b16 %v625
      %v654 = vunpack.c.h.b16 %v625
      %v655 = vunpack.c.l.b16 %v626
      %v656 = vunpack.c.h.b16 %v626
      %v657 = vunpack.c.l.b16 %v627
      %v658 = vunpack.c.h.b16 %v627
      %v659 = vunpack.c.l.b16 %v628
      %v660 = vunpack.c.h.b16 %v628
      %v661 = vunpack.c.l.b16 %v629
      %v662 = vunpack.c.h.b16 %v629
      %v663 = vpack.c.b16 %v647, %v645
      %v664 = vpack.c.b16 %v648, %v646
      %v665 = vpack.c.b16 %v651, %v649
      %v666 = vpack.c.b16 %v652, %v650
      %v667 = vpack.c.b16 %v655, %v653
      %v668 = vpack.c.b16 %v656, %v654
      %v669 = vpack.c.b16 %v659, %v657
      %v670 = vpack.c.b16 %v660, %v658
      %v671 = vpack.c.b16 %v661, %v661
      %v672 = vpack.c.b16 %v662, %v662
      %vm681 = vcmask 588800
      %v683 = vsel %vm681, %v620, 0
      %vm685 = vcmask 1043456
      %v687 = vsel %vm685, %v671, 0
      %v690 = vsel %vm685, %v672, 0
      %692 = vmatprep.subr.bf16.mxu0 %v664
      %693 = vmatpush1.bf16.msra.mxu0 %v663
      %694 = vmatprep.subr.bf16.mxu0 %v666
      %695 = vmatpush1.bf16.msra.mxu0 %v665
      %696 = vmatprep.subr.bf16.mxu0 %v668
      %697 = vmatpush1.bf16.msra.mxu0 %v667
      %698 = vmatprep.subr.bf16.mxu0 %v670
      %699 = vmatpush1.bf16.msra.mxu0 %v669
      %700 = vmatprep.subr.bf16.mxu0 %v690
      %701 = vmatpush1.bf16.msra.mxu0 %v687
      %702 = vmatprep.subr.bf16.mxu0 0
      %703 = vmatpush1.bf16.msra.mxu0 0
      %704 = vmatprep.subr.bf16.mxu0 0
      %705 = vmatpush1.bf16.msra.mxu0 0
      %706 = vmatprep.subr.bf16.mxu0 0
      %707 = vmatpush1.bf16.msra.mxu0 0
      %708 = vmatprep.subr.bf16.mxu0 0
      %709 = vmatpush1.bf16.msra.mxu0 0
      %710 = vmatprep.subr.bf16.mxu0 0
      %711 = vmatpush1.bf16.msra.mxu0 0
      %712 = vmatprep.subr.bf16.mxu0 0
      %713 = vmatpush1.bf16.msra.mxu0 0
      %714 = vmatprep.subr.bf16.mxu0 0
      %715 = vmatpush1.bf16.msra.mxu0 0
      %716 = vmatprep.subr.bf16.mxu0 0
      %717 = vmatpush1.bf16.msra.mxu0 0
      %718 = vmatprep.subr.bf16.mxu0 0
      %719 = vmatpush1.bf16.msra.mxu0 0
      %720 = vmatprep.subr.bf16.mxu0 0
      %721 = vmatpush1.bf16.msra.mxu0 0
      %722 = vmatprep.subr.bf16.mxu0 0
      %723 = vmatpush1.bf16.msra.mxu0 0
      %724 = vmatprep.mubr.bf16.mxu0 0
      %725 = vmatmul.mubr.bf16.gmra.mrb[0].mxu0 %v683
      %v726 = vpop.f32.mrb[0].mxu0
      %v727 = vadd.f32 %v634, %v726
      %v728 = vpop.f32.mrb[0].mxu0
      %v729 = vadd.f32 %v634, %v728
      %v730 = vpop.f32.mrb[0].mxu0
      %v731 = vpop.f32.mrb[0].mxu0
      %732 = vdwg.mxu0
      %v733 = vadd.f32 %v727, %v729
      %734 = vadd.xlane.f32.xlu0 %v733
      %v735 = vpop.xlane.xlu0 %734
      %v736 = vrcp.pop 256.0
      %v737 = vmul.f32 %v735, %v736
      %v738 = vsub.f32 %v727, %v737
      %v739 = vsub.f32 %v729, %v737
      %v740 = vmul.f32 %v738, %v738
      %v741 = vmul.f32 %v739, %v739
      %v742 = vadd.f32 %v740, %v741
      %743 = vadd.xlane.f32.xlu0 %v742
      %v744 = vpop.xlane.xlu0 %743
      %v745 = vmul.f32 %v744, %v736
      %v746 = vadd.f32 %v745, 1e-05
      %v747 = vrsqrt.pop %v746
      %v748 = vmul.f32 %v738, %v747
      %v749 = vmul.f32 %v739, %v747
      %v750 = vmul.f32 %v748, 0.5
      %v751 = vmul.f32 %v749, 0.5
      %v752 = vmul.f32 %v748, 0.70710677
      %v753 = vmul.f32 %v749, 0.70710677
      %v754 = vand.u32 2147483647, %v752
      %v755 = vand.u32 2147483647, %v753
      %v756 = vmul.f32 %v754, 0.3275911
      %v757 = vmul.f32 %v755, 0.3275911
      %v758 = vadd.f32 %v756, 1.0
      %v759 = vadd.f32 %v757, 1.0
      %v760 = vrcp.pop %v758
      %v761 = vmul.f32 1.0, %v760
      %v762 = vrcp.pop %v759
      %v763 = vmul.f32 1.0, %v762
      %v764 = vmul.f32 %v761, 1.0614054
      %v765 = vmul.f32 %v763, 1.0614054
      %v766 = vadd.f32 %v764, -1.4531521
      %v767 = vadd.f32 %v765, -1.4531521
      %v768 = vmul.f32 %v766, %v761
      %v769 = vmul.f32 %v767, %v763
      %v770 = vadd.f32 %v768, 1.4214138
      %v771 = vadd.f32 %v769, 1.4214138
      %v772 = vmul.f32 %v770, %v761
      %v773 = vmul.f32 %v771, %v763
      %v774 = vadd.f32 %v772, -0.28449672
      %v775 = vadd.f32 %v773, -0.28449672
      %v776 = vmul.f32 %v774, %v761
      %v777 = vmul.f32 %v775, %v763
      %v778 = vadd.f32 %v776, 0.2548296
      %v779 = vadd.f32 %v777, 0.2548296
      %v780 = vmul.f32 %v778, %v761
      %v781 = vmul.f32 %v779, %v763
      %v782 = vmul.f32 %v754, %v754
      %v783 = vmul.f32 %v755, %v755
      %v784 = vsub.f32 0.0, %v782
      %v785 = vsub.f32 0.0, %v783
      %v786 = vmul.f32 %v784, 1.442695
      %v787 = vpow.pop %v786
      %v788 = vmul.f32 %v785, 1.442695
      %v789 = vpow.pop %v788
      %v790 = vmul.f32 %v780, %v787
      %v791 = vmul.f32 %v781, %v789
      %v792 = vsub.f32 1.0, %v790
      %v793 = vsub.f32 1.0, %v791
      %vm794 = vcmp.ge.f32.partialorder %v752, 0.0
      %vm795 = vcmp.ge.f32.partialorder %v753, 0.0
      %v796 = vsub.f32 0.0, %v792
      %v797 = vsub.f32 0.0, %v793
      %v798 = vsel %vm794, %v792, %v796
      %v799 = vsel %vm795, %v793, %v797
      %v800 = vadd.f32 %v798, 1.0
      %v801 = vadd.f32 %v799, 1.0
      %v802 = vmul.f32 %v750, %v800
      %v803 = vmul.f32 %v751, %v801
      %v804 = vpack.c.bf16 %v802, %v802
      %v805 = vpack.c.bf16 %v803, %v803
      %v808 = vunpack.c.l.b16 %v804
      %v809 = vunpack.c.l.b16 %v805
      %v810 = vpack.c.b16 %v809, %v808
      %812 = vst [vmem:[#allocation2 + $0x4] sm:$0xff] %v810
      %v813 = vld [vmem:[#allocation2] sm:$0xff]
      %v814 = vld [vmem:[#allocation2 + $0x8] sm:$0xf]
      %v815 = vmul.bf16 %v813, %v436
      %v816 = vmul.bf16 %v814, %v434
      %819 = vrot.lane.b32.xlu0 %v815, 17
      %v820 = vpop.permute.xlu0 %819
      %821 = vrot.lane.b32.xlu0 %v816, 17
      %v822 = vpop.permute.xlu0 %821
      %v823 = vrot.slane %v820, 4
      %v824 = vrot.slane %v822, 4
      %v825 = vsel %vm449, %v823, %v824
      %v826 = vsel %vm451, %v820, %v825
      %828 = vst [vmem:[#allocation3] sm:$0xff] %v826
      %v829 = vld [vmem:[#allocation2] sm:$0xff]
      %v830 = vld [vmem:[#allocation2 + $0x8] sm:$0xf]
      %833 = vrot.lane.b32.xlu0 %v829, 16
      %v834 = vpop.permute.xlu0 %833
      %835 = vrot.lane.b32.xlu0 %v830, 16
      %v836 = vpop.permute.xlu0 %835
      %v837 = vrot.slane %v834, 4
      %v838 = vrot.slane %v836, 4
      %v839 = vsel %vm449, %v837, %v838
      %v840 = vsel %vm466, %v834, %v839
      %842 = vst [vmem:[#allocation3 + $0x8] sm:$0xff] %v840
      %v843 = vld [vmem:[#allocation2] sm:$0xff]
      %v844 = vld [vmem:[#allocation2 + $0x8] sm:$0xf]
      %v845 = vmul.bf16 %v843, %v495
      %v846 = vmul.bf16 %v844, %v493
      %849 = vrot.lane.b32.xlu0 %v845, 15
      %v850 = vpop.permute.xlu0 %849
      %851 = vrot.lane.b32.xlu0 %v846, 15
      %v852 = vpop.permute.xlu0 %851
      %v853 = vrot.slane %v850, 4
      %v854 = vrot.slane %v852, 4
      %v855 = vsel %vm449, %v853, %v854
      %v856 = vsel %vm509, %v850, %v855
      %858 = vst [vmem:[#allocation3 + $0x10] sm:$0xff] %v856
      %v859 = vld [vmem:[#allocation2] sm:$0xff]
      %v860 = vld [vmem:[#allocation2 + $0x8] sm:$0xf]
      %v861 = vmul.bf16 %v859, %v519
      %v862 = vmul.bf16 %v860, %v517
      %865 = vrot.lane.b32.xlu0 %v861, 1
      %v866 = vpop.permute.xlu0 %865
      %867 = vrot.lane.b32.xlu0 %v862, 1
      %v868 = vpop.permute.xlu0 %867
      %v869 = vrot.slane %v866, 4
      %v870 = vrot.slane %v868, 4
      %v871 = vsel %vm449, %v869, %v870
      %v872 = vsel %vm533, %v866, %v871
      %874 = vst [vmem:[#allocation3 + $0x18] sm:$0xff] %v872
      %v875 = vld [vmem:[#allocation2 + $0x4] sm:$0xff]
      %876 = vst [vmem:[#allocation3 + $0x20] sm:$0xff] %v875
      %v877 = vld [vmem:[#allocation2 + $0x4] sm:$0xff]
      %v878 = vld [vmem:[#allocation2 + $0xc] sm:$0xf]
      %v879 = vmul.bf16 %v877, %v544
      %v880 = vmul.bf16 %v878, %v543
      %883 = vrot.lane.b32.xlu0 %v879, 127
      %v884 = vpop.permute.xlu0 %883
      %885 = vrot.lane.b32.xlu0 %v880, 127
      %v886 = vpop.permute.xlu0 %885
      %v887 = vrot.slane %v884, 4
      %v888 = vrot.slane %v886, 4
      %v889 = vsel %vm449, %v887, %v888
      %v890 = vsel %vm518, %v884, %v889
      %892 = vst [vmem:[#allocation3 + $0x28] sm:$0xff] %v890
      %v893 = vld [vmem:[#allocation2 + $0x4] sm:$0xff]
      %v894 = vld [vmem:[#allocation2 + $0xc] sm:$0xf]
      %v895 = vmul.bf16 %v893, %v566
      %v896 = vmul.bf16 %v894, %v565
      %899 = vrot.lane.b32.xlu0 %v895, 113
      %v900 = vpop.permute.xlu0 %899
      %901 = vrot.lane.b32.xlu0 %v896, 113
      %v902 = vpop.permute.xlu0 %901
      %v903 = vrot.slane %v900, 4
      %v904 = vrot.slane %v902, 4
      %v905 = vsel %vm449, %v903, %v904
      %v906 = vsel %vm494, %v900, %v905
      %908 = vst [vmem:[#allocation3 + $0x30] sm:$0xff] %v906
      %v909 = vld [vmem:[#allocation2 + $0x4] sm:$0xff]
      %v910 = vld [vmem:[#allocation2 + $0xc] sm:$0xf]
      %913 = vrot.lane.b32.xlu0 %v909, 112
      %v914 = vpop.permute.xlu0 %913
      %915 = vrot.lane.b32.xlu0 %v910, 112
      %v916 = vpop.permute.xlu0 %915
      %v917 = vrot.slane %v914, 4
      %v918 = vrot.slane %v916, 4
      %v919 = vsel %vm449, %v917, %v918
      %v920 = vsel %vm594, %v914, %v919
      %922 = vst [vmem:[#allocation3 + $0x38] sm:$0xff] %v920
      %v923 = vld [vmem:[#allocation2 + $0x4] sm:$0xff]
      %v924 = vld [vmem:[#allocation2 + $0xc] sm:$0xf]
      %v925 = vmul.bf16 %v923, %v603
      %v926 = vmul.bf16 %v924, %v602
      %929 = vrot.lane.b32.xlu0 %v925, 111
      %v930 = vpop.permute.xlu0 %929
      %931 = vrot.lane.b32.xlu0 %v926, 111
      %v932 = vpop.permute.xlu0 %931
      %v933 = vrot.slane %v930, 4
      %v934 = vrot.slane %v932, 4
      %v935 = vsel %vm449, %v933, %v934
      %v936 = vsel %vm435, %v930, %v935
      %938 = vst [vmem:[#allocation3 + $0x40] sm:$0xff] %v936
      %v939 = vld [vmem:[%s3] sm:$0xf]
      %v940 = vld [vmem:[#allocation3] sm:$0xff]
      %v941 = vld [vmem:[#allocation3 + $0x8] sm:$0xff]
      %v942 = vld [vmem:[#allocation3 + $0x10] sm:$0xff]
      %v943 = vld [vmem:[#allocation3 + $0x18] sm:$0xff]
      %v944 = vld [vmem:[#allocation3 + $0x20] sm:$0xff]
      %v945 = vld [vmem:[#allocation3 + $0x28] sm:$0xff]
      %v946 = vld [vmem:[#allocation3 + $0x30] sm:$0xff]
      %v947 = vld [vmem:[#allocation3 + $0x38] sm:$0xff]
      %v948 = vld [vmem:[#allocation3 + $0x40] sm:$0xff]
      %v949 = vld [vmem:[%s4] sm:$0xff]
      %951 = vset.pattern.permute.xlu0 0
      %952 = vperm.xlu0 %951, %v949
      %v953 = vpop.permute.xlu0 %952
      %v964 = vunpack.c.l.b16 %v940
      %v965 = vunpack.c.h.b16 %v940
      %v966 = vunpack.c.l.b16 %v941
      %v967 = vunpack.c.h.b16 %v941
      %v968 = vunpack.c.l.b16 %v942
      %v969 = vunpack.c.h.b16 %v942
      %v970 = vunpack.c.l.b16 %v943
      %v971 = vunpack.c.h.b16 %v943
      %v972 = vunpack.c.l.b16 %v944
      %v973 = vunpack.c.h.b16 %v944
      %v974 = vunpack.c.l.b16 %v945
      %v975 = vunpack.c.h.b16 %v945
      %v976 = vunpack.c.l.b16 %v946
      %v977 = vunpack.c.h.b16 %v946
      %v978 = vunpack.c.l.b16 %v947
      %v979 = vunpack.c.h.b16 %v947
      %v980 = vunpack.c.l.b16 %v948
      %v981 = vunpack.c.h.b16 %v948
      %v982 = vpack.c.b16 %v966, %v964
      %v983 = vpack.c.b16 %v967, %v965
      %v984 = vpack.c.b16 %v970, %v968
      %v985 = vpack.c.b16 %v971, %v969
      %v986 = vpack.c.b16 %v974, %v972
      %v987 = vpack.c.b16 %v975, %v973
      %v988 = vpack.c.b16 %v978, %v976
      %v989 = vpack.c.b16 %v979, %v977
      %v990 = vpack.c.b16 %v980, %v980
      %v991 = vpack.c.b16 %v981, %v981
      %v1001 = vsel %vm681, %v939, 0
      %v1004 = vsel %vm685, %v990, 0
      %v1007 = vsel %vm685, %v991, 0
      %1009 = vmatprep.subr.bf16.mxu0 %v983
      %1010 = vmatpush1.bf16.msra.mxu0 %v982
      %1011 = vmatprep.subr.bf16.mxu0 %v985
      %1012 = vmatpush1.bf16.msra.mxu0 %v984
      %1013 = vmatprep.subr.bf16.mxu0 %v987
      %1014 = vmatpush1.bf16.msra.mxu0 %v986
      %1015 = vmatprep.subr.bf16.mxu0 %v989
      %1016 = vmatpush1.bf16.msra.mxu0 %v988
      %1017 = vmatprep.subr.bf16.mxu0 %v1007
      %1018 = vmatpush1.bf16.msra.mxu0 %v1004
      %1019 = vmatprep.subr.bf16.mxu0 0
      %1020 = vmatpush1.bf16.msra.mxu0 0
      %1021 = vmatprep.subr.bf16.mxu0 0
      %1022 = vmatpush1.bf16.msra.mxu0 0
      %1023 = vmatprep.subr.bf16.mxu0 0
      %1024 = vmatpush1.bf16.msra.mxu0 0
      %1025 = vmatprep.subr.bf16.mxu0 0
      %1026 = vmatpush1.bf16.msra.mxu0 0
      %1027 = vmatprep.subr.bf16.mxu0 0
      %1028 = vmatpush1.bf16.msra.mxu0 0
      %1029 = vmatprep.subr.bf16.mxu0 0
      %1030 = vmatpush1.bf16.msra.mxu0 0
      %1031 = vmatprep.subr.bf16.mxu0 0
      %1032 = vmatpush1.bf16.msra.mxu0 0
      %1033 = vmatprep.subr.bf16.mxu0 0
      %1034 = vmatpush1.bf16.msra.mxu0 0
      %1035 = vmatprep.subr.bf16.mxu0 0
      %1036 = vmatpush1.bf16.msra.mxu0 0
      %1037 = vmatprep.subr.bf16.mxu0 0
      %1038 = vmatpush1.bf16.msra.mxu0 0
      %1039 = vmatprep.subr.bf16.mxu0 0
      %1040 = vmatpush1.bf16.msra.mxu0 0
      %1041 = vmatprep.mubr.bf16.mxu0 0
      %1042 = vmatmul.mubr.bf16.gmra.mrb[0].mxu0 %v1001
      %v1043 = vpop.f32.mrb[0].mxu0
      %v1044 = vadd.f32 %v953, %v1043
      %v1045 = vpop.f32.mrb[0].mxu0
      %v1046 = vadd.f32 %v953, %v1045
      %v1047 = vpop.f32.mrb[0].mxu0
      %v1048 = vpop.f32.mrb[0].mxu0
      %1049 = vdwg.mxu0
      %v1050 = vadd.f32 %v1044, %v1046
      %1051 = vadd.xlane.f32.xlu0 %v1050
      %v1052 = vpop.xlane.xlu0 %1051
      %v1053 = vmul.f32 %v1052, %v736
      %v1054 = vsub.f32 %v1044, %v1053
      %v1055 = vsub.f32 %v1046, %v1053
      %v1056 = vmul.f32 %v1054, %v1054
      %v1057 = vmul.f32 %v1055, %v1055
      %v1058 = vadd.f32 %v1056, %v1057
      %1059 = vadd.xlane.f32.xlu0 %v1058
      %v1060 = vpop.xlane.xlu0 %1059
      %v1061 = vmul.f32 %v1060, %v736
      %v1062 = vadd.f32 %v1061, 1e-05
      %v1063 = vrsqrt.pop %v1062
      %v1064 = vmul.f32 %v1054, %v1063
      %v1065 = vmul.f32 %v1055, %v1063
      %v1066 = vmul.f32 %v1064, 0.5
      %v1067 = vmul.f32 %v1065, 0.5
      %v1068 = vmul.f32 %v1064, 0.70710677
      %v1069 = vmul.f32 %v1065, 0.70710677
      %v1070 = vand.u32 2147483647, %v1068
      %v1071 = vand.u32 2147483647, %v1069
      %v1072 = vmul.f32 %v1070, 0.3275911
      %v1073 = vmul.f32 %v1071, 0.3275911
      %v1074 = vadd.f32 %v1072, 1.0
      %v1075 = vadd.f32 %v1073, 1.0
      %v1076 = vrcp.pop %v1074
      %v1077 = vmul.f32 1.0, %v1076
      %v1078 = vrcp.pop %v1075
      %v1079 = vmul.f32 1.0, %v1078
      %v1080 = vmul.f32 %v1077, 1.0614054
      %v1081 = vmul.f32 %v1079, 1.0614054
      %v1082 = vadd.f32 %v1080, -1.4531521
      %v1083 = vadd.f32 %v1081, -1.4531521
      %v1084 = vmul.f32 %v1082, %v1077
      %v1085 = vmul.f32 %v1083, %v1079
      %v1086 = vadd.f32 %v1084, 1.4214138
      %v1087 = vadd.f32 %v1085, 1.4214138
      %v1088 = vmul.f32 %v1086, %v1077
      %v1089 = vmul.f32 %v1087, %v1079
      %v1090 = vadd.f32 %v1088, -0.28449672
      %v1091 = vadd.f32 %v1089, -0.28449672
      %v1092 = vmul.f32 %v1090, %v1077
      %v1093 = vmul.f32 %v1091, %v1079
      %v1094 = vadd.f32 %v1092, 0.2548296
      %v1095 = vadd.f32 %v1093, 0.2548296
      %v1096 = vmul.f32 %v1094, %v1077
      %v1097 = vmul.f32 %v1095, %v1079
      %v1098 = vmul.f32 %v1070, %v1070
      %v1099 = vmul.f32 %v1071, %v1071
      %v1100 = vsub.f32 0.0, %v1098
      %v1101 = vsub.f32 0.0, %v1099
      %v1102 = vmul.f32 %v1100, 1.442695
      %v1103 = vpow.pop %v1102
      %v1104 = vmul.f32 %v1101, 1.442695
      %v1105 = vpow.pop %v1104
      %v1106 = vmul.f32 %v1096, %v1103
      %v1107 = vmul.f32 %v1097, %v1105
      %v1108 = vsub.f32 1.0, %v1106
      %v1109 = vsub.f32 1.0, %v1107
      %vm1110 = vcmp.ge.f32.partialorder %v1068, 0.0
      %vm1111 = vcmp.ge.f32.partialorder %v1069, 0.0
      %v1112 = vsub.f32 0.0, %v1108
      %v1113 = vsub.f32 0.0, %v1109
      %v1114 = vsel %vm1110, %v1108, %v1112
      %v1115 = vsel %vm1111, %v1109, %v1113
      %v1116 = vadd.f32 %v1114, 1.0
      %v1117 = vadd.f32 %v1115, 1.0
      %v1118 = vmul.f32 %v1066, %v1116
      %v1119 = vmul.f32 %v1067, %v1117
      %1120 = vst [vmem:[%s366] sm:$0xff] %v1118
      %1121 = vst [vmem:[%s366 + $0x8] sm:$0xff] %v1119
      %v1122 = vpack.c.bf16 %v1118, %v1118
      %v1123 = vpack.c.bf16 %v1119, %v1119
      %v1126 = vunpack.c.l.b16 %v1122
      %v1127 = vunpack.c.l.b16 %v1123
      %v1128 = vpack.c.b16 %v1127, %v1126
      %1130 = vst [vmem:[#allocation2 + $0x4] sm:$0xff] %v1128
      %v1131 = vld [vmem:[#allocation2] sm:$0xff]
      %v1132 = vld [vmem:[#allocation2 + $0x8] sm:$0xf]
      %v1133 = vmul.bf16 %v1131, %v436
      %v1134 = vmul.bf16 %v1132, %v434
      %1137 = vrot.lane.b32.xlu0 %v1133, 17
      %v1138 = vpop.permute.xlu0 %1137
      %1139 = vrot.lane.b32.xlu0 %v1134, 17
      %v1140 = vpop.permute.xlu0 %1139
      %v1141 = vrot.slane %v1138, 4
      %v1142 = vrot.slane %v1140, 4
      %v1143 = vsel %vm449, %v1141, %v1142
      %v1144 = vsel %vm451, %v1138, %v1143
      %1146 = vst [vmem:[#allocation3] sm:$0xff] %v1144
      %v1147 = vld [vmem:[#allocation2] sm:$0xff]
      %v1148 = vld [vmem:[#allocation2 + $0x8] sm:$0xf]
      %1151 = vrot.lane.b32.xlu0 %v1147, 16
      %v1152 = vpop.permute.xlu0 %1151
      %1153 = vrot.lane.b32.xlu0 %v1148, 16
      %v1154 = vpop.permute.xlu0 %1153
      %v1155 = vrot.slane %v1152, 4
      %v1156 = vrot.slane %v1154, 4
      %v1157 = vsel %vm449, %v1155, %v1156
      %v1158 = vsel %vm466, %v1152, %v1157
      %1160 = vst [vmem:[#allocation3 + $0x8] sm:$0xff] %v1158
      %v1161 = vld [vmem:[#allocation2] sm:$0xff]
      %v1162 = vld [vmem:[#allocation2 + $0x8] sm:$0xf]
      %v1163 = vmul.bf16 %v1161, %v495
      %v1164 = vmul.bf16 %v1162, %v493
      %1167 = vrot.lane.b32.xlu0 %v1163, 15
      %v1168 = vpop.permute.xlu0 %1167
      %1169 = vrot.lane.b32.xlu0 %v1164, 15
      %v1170 = vpop.permute.xlu0 %1169
      %v1171 = vrot.slane %v1168, 4
      %v1172 = vrot.slane %v1170, 4
      %v1173 = vsel %vm449, %v1171, %v1172
      %v1174 = vsel %vm509, %v1168, %v1173
      %1176 = vst [vmem:[#allocation3 + $0x10] sm:$0xff] %v1174
      %v1177 = vld [vmem:[#allocation2] sm:$0xff]
      %v1178 = vld [vmem:[#allocation2 + $0x8] sm:$0xf]
      %v1179 = vmul.bf16 %v1177, %v519
      %v1180 = vmul.bf16 %v1178, %v517
      %1183 = vrot.lane.b32.xlu0 %v1179, 1
      %v1184 = vpop.permute.xlu0 %1183
      %1185 = vrot.lane.b32.xlu0 %v1180, 1
      %v1186 = vpop.permute.xlu0 %1185
      %v1187 = vrot.slane %v1184, 4
      %v1188 = vrot.slane %v1186, 4
      %v1189 = vsel %vm449, %v1187, %v1188
      %v1190 = vsel %vm533, %v1184, %v1189
      %1192 = vst [vmem:[#allocation3 + $0x18] sm:$0xff] %v1190
      %v1193 = vld [vmem:[#allocation2 + $0x4] sm:$0xff]
      %1194 = vst [vmem:[#allocation3 + $0x20] sm:$0xff] %v1193
      %v1195 = vld [vmem:[#allocation2 + $0x4] sm:$0xff]
      %v1196 = vld [vmem:[#allocation2 + $0xc] sm:$0xf]
      %v1197 = vmul.bf16 %v1195, %v544
      %v1198 = vmul.bf16 %v1196, %v543
      %1201 = vrot.lane.b32.xlu0 %v1197, 127
      %v1202 = vpop.permute.xlu0 %1201
      %1203 = vrot.lane.b32.xlu0 %v1198, 127
      %v1204 = vpop.permute.xlu0 %1203
      %v1205 = vrot.slane %v1202, 4
      %v1206 = vrot.slane %v1204, 4
      %v1207 = vsel %vm449, %v1205, %v1206
      %v1208 = vsel %vm518, %v1202, %v1207
      %1210 = vst [vmem:[#allocation3 + $0x28] sm:$0xff] %v1208
      %v1211 = vld [vmem:[#allocation2 + $0x4] sm:$0xff]
      %v1212 = vld [vmem:[#allocation2 + $0xc] sm:$0xf]
      %v1213 = vmul.bf16 %v1211, %v566
      %v1214 = vmul.bf16 %v1212, %v565
      %1217 = vrot.lane.b32.xlu0 %v1213, 113
      %v1218 = vpop.permute.xlu0 %1217
      %1219 = vrot.lane.b32.xlu0 %v1214, 113
      %v1220 = vpop.permute.xlu0 %1219
      %v1221 = vrot.slane %v1218, 4
      %v1222 = vrot.slane %v1220, 4
      %v1223 = vsel %vm449, %v1221, %v1222
      %v1224 = vsel %vm494, %v1218, %v1223
      %1226 = vst [vmem:[#allocation3 + $0x30] sm:$0xff] %v1224
      %v1227 = vld [vmem:[#allocation2 + $0x4] sm:$0xff]
      %v1228 = vld [vmem:[#allocation2 + $0xc] sm:$0xf]
      %1231 = vrot.lane.b32.xlu0 %v1227, 112
      %v1232 = vpop.permute.xlu0 %1231
      %1233 = vrot.lane.b32.xlu0 %v1228, 112
      %v1234 = vpop.permute.xlu0 %1233
      %v1235 = vrot.slane %v1232, 4
      %v1236 = vrot.slane %v1234, 4
      %v1237 = vsel %vm449, %v1235, %v1236
      %v1238 = vsel %vm594, %v1232, %v1237
      %1240 = vst [vmem:[#allocation3 + $0x38] sm:$0xff] %v1238
      %v1241 = vld [vmem:[#allocation2 + $0x4] sm:$0xff]
      %v1242 = vld [vmem:[#allocation2 + $0xc] sm:$0xf]
      %v1243 = vmul.bf16 %v1241, %v603
      %v1244 = vmul.bf16 %v1242, %v602
      %1247 = vrot.lane.b32.xlu0 %v1243, 111
      %v1248 = vpop.permute.xlu0 %1247
      %1249 = vrot.lane.b32.xlu0 %v1244, 111
      %v1250 = vpop.permute.xlu0 %1249
      %v1251 = vrot.slane %v1248, 4
      %v1252 = vrot.slane %v1250, 4
      %v1253 = vsel %vm449, %v1251, %v1252
      %v1254 = vsel %vm435, %v1248, %v1253
      %1256 = vst [vmem:[#allocation3 + $0x40] sm:$0xff] %v1254
      %v1257 = vld [vmem:[%s5] sm:$0xf]
      %v1258 = vld [vmem:[#allocation3] sm:$0xff]
      %v1259 = vld [vmem:[#allocation3 + $0x8] sm:$0xff]
      %v1260 = vld [vmem:[#allocation3 + $0x10] sm:$0xff]
      %v1261 = vld [vmem:[#allocation3 + $0x18] sm:$0xff]
      %v1262 = vld [vmem:[#allocation3 + $0x20] sm:$0xff]
      %v1263 = vld [vmem:[#allocation3 + $0x28] sm:$0xff]
      %v1264 = vld [vmem:[#allocation3 + $0x30] sm:$0xff]
      %v1265 = vld [vmem:[#allocation3 + $0x38] sm:$0xff]
      %v1266 = vld [vmem:[#allocation3 + $0x40] sm:$0xff]
      %v1267 = vld [vmem:[%s6] sm:$0xff]
      %1269 = vset.pattern.permute.xlu0 0
      %1270 = vperm.xlu0 %1269, %v1267
      %v1271 = vpop.permute.xlu0 %1270
      %v1282 = vunpack.c.l.b16 %v1258
      %v1283 = vunpack.c.h.b16 %v1258
      %v1284 = vunpack.c.l.b16 %v1259
      %v1285 = vunpack.c.h.b16 %v1259
      %v1286 = vunpack.c.l.b16 %v1260
      %v1287 = vunpack.c.h.b16 %v1260
      %v1288 = vunpack.c.l.b16 %v1261
      %v1289 = vunpack.c.h.b16 %v1261
      %v1290 = vunpack.c.l.b16 %v1262
      %v1291 = vunpack.c.h.b16 %v1262
      %v1292 = vunpack.c.l.b16 %v1263
      %v1293 = vunpack.c.h.b16 %v1263
      %v1294 = vunpack.c.l.b16 %v1264
      %v1295 = vunpack.c.h.b16 %v1264
      %v1296 = vunpack.c.l.b16 %v1265
      %v1297 = vunpack.c.h.b16 %v1265
      %v1298 = vunpack.c.l.b16 %v1266
      %v1299 = vunpack.c.h.b16 %v1266
      %v1300 = vpack.c.b16 %v1284, %v1282
      %v1301 = vpack.c.b16 %v1285, %v1283
      %v1302 = vpack.c.b16 %v1288, %v1286
      %v1303 = vpack.c.b16 %v1289, %v1287
      %v1304 = vpack.c.b16 %v1292, %v1290
      %v1305 = vpack.c.b16 %v1293, %v1291
      %v1306 = vpack.c.b16 %v1296, %v1294
      %v1307 = vpack.c.b16 %v1297, %v1295
      %v1308 = vpack.c.b16 %v1298, %v1298
      %v1309 = vpack.c.b16 %v1299, %v1299
      %v1319 = vsel %vm681, %v1257, 0
      %v1322 = vsel %vm685, %v1308, 0
      %v1325 = vsel %vm685, %v1309, 0
      %1327 = vmatprep.subr.bf16.mxu0 %v1301
      %1328 = vmatpush1.bf16.msra.mxu0 %v1300
      %1329 = vmatprep.subr.bf16.mxu0 %v1303
      %1330 = vmatpush1.bf16.msra.mxu0 %v1302
      %1331 = vmatprep.subr.bf16.mxu0 %v1305
      %1332 = vmatpush1.bf16.msra.mxu0 %v1304
      %1333 = vmatprep.subr.bf16.mxu0 %v1307
      %1334 = vmatpush1.bf16.msra.mxu0 %v1306
      %1335 = vmatprep.subr.bf16.mxu0 %v1325
      %1336 = vmatpush1.bf16.msra.mxu0 %v1322
      %1337 = vmatprep.subr.bf16.mxu0 0
      %1338 = vmatpush1.bf16.msra.mxu0 0
      %1339 = vmatprep.subr.bf16.mxu0 0
      %1340 = vmatpush1.bf16.msra.mxu0 0
      %1341 = vmatprep.subr.bf16.mxu0 0
      %1342 = vmatpush1.bf16.msra.mxu0 0
      %1343 = vmatprep.subr.bf16.mxu0 0
      %1344 = vmatpush1.bf16.msra.mxu0 0
      %1345 = vmatprep.subr.bf16.mxu0 0
      %1346 = vmatpush1.bf16.msra.mxu0 0
      %1347 = vmatprep.subr.bf16.mxu0 0
      %1348 = vmatpush1.bf16.msra.mxu0 0
      %1349 = vmatprep.subr.bf16.mxu0 0
      %1350 = vmatpush1.bf16.msra.mxu0 0
      %1351 = vmatprep.subr.bf16.mxu0 0
      %1352 = vmatpush1.bf16.msra.mxu0 0
      %1353 = vmatprep.subr.bf16.mxu0 0
      %1354 = vmatpush1.bf16.msra.mxu0 0
      %1355 = vmatprep.subr.bf16.mxu0 0
      %1356 = vmatpush1.bf16.msra.mxu0 0
      %1357 = vmatprep.subr.bf16.mxu0 0
      %1358 = vmatpush1.bf16.msra.mxu0 0
      %1359 = vmatprep.mubr.bf16.mxu0 0
      %1360 = vmatmul.mubr.bf16.gmra.mrb[0].mxu0 %v1319
      %v1361 = vpop.f32.mrb[0].mxu0
      %v1362 = vadd.f32 %v1271, %v1361
      %v1363 = vpop.f32.mrb[0].mxu0
      %v1364 = vadd.f32 %v1271, %v1363
      %v1365 = vpop.f32.mrb[0].mxu0
      %v1366 = vpop.f32.mrb[0].mxu0
      %1367 = vdwg.mxu0
      %v1368 = vld [vmem:[%s7] sm:$0xff]
      %v1369 = vld [vmem:[%s7 + $0x8] sm:$0xff]
      %v1370 = vld [vmem:[%s7 + $0x10] sm:$0xff]
      %v1371 = vld [vmem:[%s7 + $0x18] sm:$0xff]
      %v1372 = vld [vmem:[%s7 + $0x20] sm:$0xff]
      %v1373 = vld [vmem:[%s7 + $0x28] sm:$0xff]
      %v1374 = vld [vmem:[%s7 + $0x30] sm:$0xff]
      %v1375 = vld [vmem:[%s7 + $0x38] sm:$0xff]
      %v1376 = vld [vmem:[%s7 + $0x40] sm:$0xff]
      %v1377 = vld [vmem:[%s7 + $0x48] sm:$0xff]
      %v1378 = vld [vmem:[%s7 + $0x50] sm:$0xff]
      %v1379 = vld [vmem:[%s7 + $0x58] sm:$0xff]
      %v1380 = vld [vmem:[%s7 + $0x60] sm:$0xff]
      %v1381 = vld [vmem:[%s7 + $0x68] sm:$0xff]
      %v1382 = vld [vmem:[%s7 + $0x70] sm:$0xff]
      %v1383 = vld [vmem:[%s7 + $0x78] sm:$0xff]
      %v1384 = vld [vmem:[%s7 + $0x80] sm:$0xff]
      %v1385 = vld [vmem:[%s7 + $0x88] sm:$0xff]
      %v1386 = vld [vmem:[%s7 + $0x90] sm:$0xff]
      %v1387 = vld [vmem:[%s7 + $0x98] sm:$0xff]
      %v1388 = vld [vmem:[%s7 + $0xa0] sm:$0xff]
      %v1389 = vld [vmem:[%s7 + $0xa8] sm:$0xff]
      %v1390 = vld [vmem:[%s7 + $0xb0] sm:$0xff]
      %v1391 = vld [vmem:[%s7 + $0xb8] sm:$0xff]
      %v1392 = vld [vmem:[%s7 + $0xc0] sm:$0xff]
      %v1393 = vld [vmem:[%s7 + $0xc8] sm:$0xff]
      %v1394 = vld [vmem:[%s7 + $0xd0] sm:$0xff]
      %v1395 = vld [vmem:[%s7 + $0xd8] sm:$0xff]
      %v1396 = vld [vmem:[%s7 + $0xe0] sm:$0xff]
      %v1397 = vld [vmem:[%s7 + $0xe8] sm:$0xff]
      %v1398 = vld [vmem:[%s7 + $0xf0] sm:$0xff]
      %v1399 = vld [vmem:[%s7 + $0xf8] sm:$0xff]
      %1400 = vmatprep.subr.mxu0 0.0
      %1401 = vmatpush1.msra.mxu0 %v1368
      %1402 = vmatprep.subr.mxu0 0.0
      %1403 = vmatpush1.msra.mxu0 %v1369
      %1404 = vmatprep.subr.mxu0 0.0
      %1405 = vmatpush1.msra.mxu0 %v1370
      %1406 = vmatprep.subr.mxu0 0.0
      %1407 = vmatpush1.msra.mxu0 %v1371
      %1408 = vmatprep.subr.mxu0 0.0
      %1409 = vmatpush1.msra.mxu0 %v1372
      %1410 = vmatprep.subr.mxu0 0.0
      %1411 = vmatpush1.msra.mxu0 %v1373
      %1412 = vmatprep.subr.mxu0 0.0
      %1413 = vmatpush1.msra.mxu0 %v1374
      %1414 = vmatprep.subr.mxu0 0.0
      %1415 = vmatpush1.msra.mxu0 %v1375
      %1416 = vmatprep.subr.mxu0 0.0
      %1417 = vmatpush1.msra.mxu0 %v1376
      %1418 = vmatprep.subr.mxu0 0.0
      %1419 = vmatpush1.msra.mxu0 %v1377
      %1420 = vmatprep.subr.mxu0 0.0
      %1421 = vmatpush1.msra.mxu0 %v1378
      %1422 = vmatprep.subr.mxu0 0.0
      %1423 = vmatpush1.msra.mxu0 %v1379
      %1424 = vmatprep.subr.mxu0 0.0
      %1425 = vmatpush1.msra.mxu0 %v1380
      %1426 = vmatprep.subr.mxu0 0.0
      %1427 = vmatpush1.msra.mxu0 %v1381
      %1428 = vmatprep.subr.mxu0 0.0
      %1429 = vmatpush1.msra.mxu0 %v1382
      %1430 = vmatprep.subr.mxu0 0.0
      %1431 = vmatpush1.msra.mxu0 %v1383
      %1432 = vmatprep.subr.mxu0 0.0
      %1433 = vmatpush1.msra.mxu0 %v1384
      %1434 = vmatprep.subr.mxu0 0.0
      %1435 = vmatpush1.msra.mxu0 %v1385
      %1436 = vmatprep.subr.mxu0 0.0
      %1437 = vmatpush1.msra.mxu0 %v1386
      %1438 = vmatprep.subr.mxu0 0.0
      %1439 = vmatpush1.msra.mxu0 %v1387
      %1440 = vmatprep.subr.mxu0 0.0
      %1441 = vmatpush1.msra.mxu0 %v1388
      %1442 = vmatprep.subr.mxu0 0.0
      %1443 = vmatpush1.msra.mxu0 %v1389
      %1444 = vmatprep.subr.mxu0 0.0
      %1445 = vmatpush1.msra.mxu0 %v1390
      %1446 = vmatprep.subr.mxu0 0.0
      %1447 = vmatpush1.msra.mxu0 %v1391
      %1448 = vmatprep.subr.mxu0 0.0
      %1449 = vmatpush1.msra.mxu0 %v1392
      %1450 = vmatprep.subr.mxu0 0.0
      %1451 = vmatpush1.msra.mxu0 %v1393
      %1452 = vmatprep.subr.mxu0 0.0
      %1453 = vmatpush1.msra.mxu0 %v1394
      %1454 = vmatprep.subr.mxu0 0.0
      %1455 = vmatpush1.msra.mxu0 %v1395
      %1456 = vmatprep.subr.mxu0 0.0
      %1457 = vmatpush1.msra.mxu0 %v1396
      %1458 = vmatprep.subr.mxu0 0.0
      %1459 = vmatpush1.msra.mxu0 %v1397
      %1460 = vmatprep.subr.mxu0 0.0
      %1461 = vmatpush1.msra.mxu0 %v1398
      %1462 = vmatprep.subr.mxu0 0.0
      %1463 = vmatpush1.msra.mxu0 %v1399
      %1464 = vmatprep.mubr.f32.mxu0 %v1364
      %1465 = vmatmul.mubr.f32.gmra.mrb[0].mxu0 %v1362
      %v1466 = vpop.f32.mrb[0].mxu0
      %v1467 = vadd.f32 0.0, %v1466
      %v1468 = vpop.f32.mrb[0].mxu0
      %1469 = vdwg.mxu0
      %vm1470 = vcmask 523264
      %1471 = vst.msk [vmem:[%s370] sm:$0xff] %vm1470, %v1467
      %p1472 = scmp.lt.s32.totalorder %s22, 1
      %s1473 = scalar_select %p1472, %s22, 1
      %s1474 = smul.addr %s1473, 2
      %s1475 = smul.addr %s1474, 8
      %s1476 = scalar_lea.vmem %s9, %s1475
      %p1477 = scmp.lt.s32.totalorder %s22, 1
      %s1478 = scalar_select %p1477, %s22, 1
      %s1479 = smul.addr %s1478, 8
      %s1480 = scalar_lea.vmem %s10, %s1479
      // Predicated region
      $region57: #{ginka_encoder.1} parent=55 // pred_check
        %p1481 = pneg %p234
      $region58: #{ginka_encoder.1} parent=55 // pred_check_branch
        %1483 = sbr.rel (%p1481) target = $region60
      $region59: #{ginka_encoder.1} parent=55 // pred_region
        _
      $region60: #{ginka_encoder.1} parent=55 // pred_fallthru
        _
      // Predicated region
      $region61: #{ginka_encoder.1} parent=55 // pred_check
        %p1484 = pneg %p260
      $region62: #{ginka_encoder.1} parent=55 // pred_check_branch
        %1486 = sbr.rel (%p1484) target = $region64
      $region63: #{ginka_encoder.1} parent=55 // pred_region
        _
      $region64: #{ginka_encoder.1} parent=55 // pred_fallthru
        _
    $region56: #{ginka_encoder.1} parent=5 // pred_fallthru
      _
    %p1487 = scmp.le.s32.totalorder 2, %s17
    // Predicated region
    $region65: #{ginka_encoder.1} parent=5 // pred_check
      %p1488 = pneg %p1487
    $region66: #{ginka_encoder.1} parent=5 // pred_check_branch
      %1490 = sbr.rel (%p1488) target = $region68
    $region67: #{ginka_encoder.1} parent=5 // pred_region
      %s1491 = ssub.s32 %s17, 2
      // Predicated region
      $region69: #{ginka_encoder.1} parent=67 // pred_check
        %p1492 = pneg %p240
      $region70: #{ginka_encoder.1} parent=67 // pred_check_branch
        %1494 = sbr.rel (%p1492) target = $region72
      $region71: #{ginka_encoder.1} parent=67 // pred_region
        %p1495 = scmp.lt.s32.totalorder %s23, 1
        %s1496 = scalar_select %p1495, %s23, 1
        %s1497 = smul.addr %s1496, 2
        %s1498 = smul.addr %s1497, 8
        %s1499 = scalar_lea.vmem %s9, %s1498
      $region72: #{ginka_encoder.1} parent=67 // pred_fallthru
        _
      // Predicated region
      $region73: #{ginka_encoder.1} parent=67 // pred_check
        %p1500 = pneg %p266
      $region74: #{ginka_encoder.1} parent=67 // pred_check_branch
        %1502 = sbr.rel (%p1500) target = $region76
      $region75: #{ginka_encoder.1} parent=67 // pred_region
        %p1503 = scmp.lt.s32.totalorder %s23, 1
        %s1504 = scalar_select %p1503, %s23, 1
        %s1505 = smul.addr %s1504, 8
        %s1506 = scalar_lea.vmem %s10, %s1505
      $region76: #{ginka_encoder.1} parent=67 // pred_fallthru
        _
    $region68: #{ginka_encoder.1} parent=5 // pred_fallthru
      _
  $region6: #{ginka_encoder.1} parent=0 // loop_footer
    %s21 = sadd.s32 1, %s17
  $region7: #{ginka_encoder.1} parent=0 // loop_footer_branch
    %16 = sbr.rel target = $region3
  $region8: #{ginka_encoder.1} parent=0 // loop_exit
    _

</llo_original>
